<compile_context>
chip_gen: v7x
topology: tpu7x:2x2x1
jax: 0.10.0
libtpu: 0.0.40
codegen_flags: <defaults>
</compile_context>

<pallas_src>
import jax
import jax.numpy as jnp
import numpy as np
from jax import lax
from jax.experimental import pallas as pl
from jax.experimental.pallas import tpu as pltpu

# ----------------------------- model sizes (scaled-down) --------------------
B = 2            # batch
N = 128          # num_points            (2500 in the full model)
F = 256          # feature_size          (1024 in the full model)
K = 32           # cluster_size          (64   in the full model)
D = 128          # output_dim            (1024 in the full model)
# STN3d (k=3, use_bn=False): convs 3->S1->S2->S3, fcs S3->SF1->SF2->9
S1, S2, S3 = 32, 64, 128
SF1, SF2 = 64, 32
# PointNetfeat convs: 3->P1->P2->P3->P4->F
P1, P2, P3, P4 = 32, 32, 32, 64
BN_EPS = 1e-5
# tile of the K*F contraction axis in the hidden projection
# (v5e/v6e: ~8192 rows is fine against 128 MiB VMEM; v7x: keep ~4096 for 64 MiB)
HID_CHUNK = 4096
assert (K * F) % HID_CHUNK == 0


def _relu(x):
    return jnp.maximum(x, 0.0)


def _const_spec(arr):
    """Whole-array block with a constant index map (weights / biases)."""
    zeros = (0,) * arr.ndim
    return pl.BlockSpec(arr.shape, lambda *_: zeros)


# ----------------------------- kernels --------------------------------------
def stn_kernel(x_ref, w1, b1, w2, b2, w3, b3,
               fw1, fb1, fw2, fb2, fw3, fb3, out_ref):
    """Full STN3d: per-point MLP (3->S1->S2->S3) + max over points + FC head.

    Emits the 9-vector fc3 output (identity offset added on host); one batch
    element per grid step.
    """
    h = x_ref[0]                                                     # (N, 3)
    h = _relu(jnp.dot(h, w1[...], preferred_element_type=jnp.float32) + b1[...])
    h = _relu(jnp.dot(h, w2[...], preferred_element_type=jnp.float32) + b2[...])
    h = _relu(jnp.dot(h, w3[...], preferred_element_type=jnp.float32) + b3[...])
    g = jnp.max(h, axis=0, keepdims=True)                            # (1, S3)
    g = _relu(jnp.dot(g, fw1[...], preferred_element_type=jnp.float32) + fb1[...])
    g = _relu(jnp.dot(g, fw2[...], preferred_element_type=jnp.float32) + fb2[...])
    out_ref[0] = jnp.dot(g, fw3[...], preferred_element_type=jnp.float32) + fb3[...]


def feat_vlad_kernel(x_ref, t_ref, w1, b1, w2, b2, w3, b3, w4, b4, w5, b5,
                     cw, bn1s, bn1b, cw2, out_ref):
    """Fused: input transform (folded into conv1) + PointNetfeat + NetVLAD core.

    Produces the VLAD descriptor in lane-dense (K, F) layout, intra- and
    globally L2-normalized.  One batch element per grid step — the (N, F)
    feature block lives only in VMEM/vregs, never in HBM.
    """
    pts = x_ref[0]                                                   # (N, 3)
    tr = t_ref[0]                                                    # (3, 3)
    # fold the 3x3 input transform into conv1: (pts @ tr) @ w1 == pts @ (tr @ w1)
    tw1 = jnp.dot(tr, w1[...], preferred_element_type=jnp.float32)   # (3, S1)
    h = _relu(jnp.dot(pts, tw1, preferred_element_type=jnp.float32) + b1[...])
    # per-point MLP (1x1 convs), eval-mode BN folded into the weights.
    # TODO(synk): on v5e conv2-4 weights/activations could also be bf16.
    h = _relu(jnp.dot(h, w2[...], preferred_element_type=jnp.float32) + b2[...])
    h = _relu(jnp.dot(h, w3[...], preferred_element_type=jnp.float32) + b3[...])
    h = _relu(jnp.dot(h, w4[...], preferred_element_type=jnp.float32) + b4[...])
    # conv5 (bn5, no relu): bf16 operands, f32 accumulation (MXU-native dtype)
    feat = jnp.dot(h.astype(jnp.bfloat16), w5[...],
                   preferred_element_type=jnp.float32) + b5[...]     # (N, F)
    feat_b = feat.astype(jnp.bfloat16)

    # --- NetVLAD soft-assignment -------------------------------------------
    act = jnp.dot(feat_b, cw[...], preferred_element_type=jnp.float32)   # (N, K)
    act = act * bn1s[...] + bn1b[...]
    m = jnp.max(act, axis=-1, keepdims=True)
    e = jnp.exp(act - m)
    # exact reciprocal (approx=True would bias the softmax normalization)
    act = e * pl.reciprocal(jnp.sum(e, axis=-1, keepdims=True), approx=False)

    # per-cluster assignment mass as a (K, 1) column, computed on the MXU
    # (avoids a lane->sublane relayout of the (1, K) reduction result)
    ones_n = jnp.ones((act.shape[0], 1), jnp.float32)
    a_col = lax.dot_general(act, ones_n, (((0,), (0,)), ((), ())),
                            preferred_element_type=jnp.float32)          # (K, 1)

    # VLAD aggregation in (K, F): contract N directly, no feat.T materialized
    vlad = lax.dot_general(act.astype(jnp.bfloat16), feat_b,
                           (((0,), (0,)), ((), ())),
                           preferred_element_type=jnp.float32)           # (K, F)
    vlad = vlad - a_col * cw2[...]                                       # cw2 is (K, F)

    # intra-normalization (over the feature dim, per cluster) — lane reduce
    ss = jnp.sum(vlad * vlad, axis=-1, keepdims=True)                    # (K, 1)
    vlad = vlad * lax.rsqrt(jnp.maximum(ss, 1e-24))
    # global L2 normalization of the flattened descriptor
    tot = jnp.sum(jnp.sum(vlad * vlad, axis=-1, keepdims=True),
                  axis=0, keepdims=True)                                 # (1, 1)
    out_ref[0] = vlad * lax.rsqrt(jnp.maximum(tot, 1e-24))               # (K, F)


def netvlad_head_kernel(flat_ref, hid_ref, bn2s, bn2b, gw, gbs, gbb,
                        out_ref, acc_ref):
    """Hidden projection tiled over the K*F contraction + BN2 + context gating.

    The whole batch is the matmul M dimension, so hidden_w is streamed from
    HBM exactly once per forward pass.
    """
    c = pl.program_id(0)

    @pl.when(c == 0)
    def _():
        acc_ref[...] = jnp.zeros_like(acc_ref)

    acc_ref[...] += jnp.dot(flat_ref[...].astype(jnp.bfloat16), hid_ref[...],
                            preferred_element_type=jnp.float32)          # (B, D)

    @pl.when(c == pl.num_programs(0) - 1)
    def _():
        proj = acc_ref[...] * bn2s[...] + bn2b[...]
        gates = jnp.dot(proj.astype(jnp.bfloat16), gw[...],
                        preferred_element_type=jnp.float32)
        gates = gates * gbs[...] + gbb[...]
        gates = 1.0 / (1.0 + jnp.exp(-gates))
        out_ref[...] = proj * gates


# ----------------------------- pallas_call wrappers --------------------------
def stn(pts, p):
    ws = [p['stn_w1'], p['stn_b1'], p['stn_w2'], p['stn_b2'],
          p['stn_w3'], p['stn_b3'],
          p['stn_fc1_w'], p['stn_fc1_b'], p['stn_fc2_w'], p['stn_fc2_b'],
          p['stn_fc3_w'], p['stn_fc3_b']]
    return pl.pallas_call(
        stn_kernel,
        out_shape=jax.ShapeDtypeStruct((B, 1, 9), jnp.float32),
        grid=(B,),
        in_specs=[pl.BlockSpec((1, N, 3), lambda b: (b, 0, 0))]
                 + [_const_spec(w) for w in ws],
        out_specs=pl.BlockSpec((1, 1, 9), lambda b: (b, 0, 0)),
        compiler_params=pltpu.CompilerParams(
            dimension_semantics=("parallel",)),
    )(pts, *ws)


def feat_vlad(pts, trans, p):
    ws = [p['pf_w1'], p['pf_b1'], p['pf_w2'], p['pf_b2'],
          p['pf_w3'], p['pf_b3'], p['pf_w4'], p['pf_b4'],
          p['pf_w5'], p['pf_b5'],
          p['cluster_w'], p['bn1_s'], p['bn1_b'],
          p['cluster_w2_kf']]                        # precomputed (K, F) layout
    return pl.pallas_call(
        feat_vlad_kernel,
        out_shape=jax.ShapeDtypeStruct((B, K, F), jnp.float32),   # lane-dense
        grid=(B,),
        in_specs=[pl.BlockSpec((1, N, 3), lambda b: (b, 0, 0)),
                  pl.BlockSpec((1, 3, 3), lambda b: (b, 0, 0))]
                 + [_const_spec(w) for w in ws],
        out_specs=pl.BlockSpec((1, K, F), lambda b: (b, 0, 0)),
        compiler_params=pltpu.CompilerParams(
            dimension_semantics=("parallel",)),
    )(pts, trans, *ws)


def netvlad_head(flat, p):
    n_chunks = (K * F) // HID_CHUNK
    ws = [p['bn2_s'], p['bn2_b'], p['gating_w'], p['gbn_s'], p['gbn_b']]
    return pl.pallas_call(
        netvlad_head_kernel,
        out_shape=jax.ShapeDtypeStruct((B, D), jnp.float32),
        grid=(n_chunks,),
        in_specs=[pl.BlockSpec((B, HID_CHUNK), lambda c: (0, c)),
                  pl.BlockSpec((HID_CHUNK, D), lambda c: (c, 0)),
                  ]
                 + [_const_spec(w) for w in ws],
        out_specs=pl.BlockSpec((B, D), lambda c: (0, 0)),
        scratch_shapes=[pltpu.VMEM((B, D), jnp.float32)],
        compiler_params=pltpu.CompilerParams(
            dimension_semantics=("arbitrary",)),
    )(flat, p['hidden_w_kf'], *ws)


# ----------------------------- parameters ------------------------------------
def make_params(key):
    ks = list(jax.random.split(key, 32))

    def nrm(shape, scale):
        return jax.random.normal(ks.pop(), shape, jnp.float32) * jnp.float32(scale)

    bn_scale = np.float32(1.0 / np.sqrt(1.0 + BN_EPS))  # eval-mode BN, default buffers
    p = {}
    # STN3d (k=3, use_bn=False)
    p['stn_w1'] = nrm((3, S1), 1 / np.sqrt(3));    p['stn_b1'] = nrm((1, S1), 0.02)
    p['stn_w2'] = nrm((S1, S2), 1 / np.sqrt(S1));  p['stn_b2'] = nrm((1, S2), 0.02)
    p['stn_w3'] = nrm((S2, S3), 1 / np.sqrt(S2));  p['stn_b3'] = nrm((1, S3), 0.02)
    p['stn_fc1_w'] = nrm((S3, SF1), 1 / np.sqrt(S3)); p['stn_fc1_b'] = nrm((1, SF1), 0.02)
    p['stn_fc2_w'] = nrm((SF1, SF2), 1 / np.sqrt(SF1)); p['stn_fc2_b'] = nrm((1, SF2), 0.02)
    # NOTE: the PyTorch module zero-inits fc3 (identity transform); small nonzero
    # values are used here so the transform-fold path is actually exercised.
    p['stn_fc3_w'] = nrm((SF2, 9), 0.05)
    p['stn_fc3_b'] = nrm((1, 9), 0.02)
    # PointNetfeat convs with eval-mode BN folded in (scale=1/sqrt(1+eps), shift=0)
    chans = [3, P1, P2, P3, P4, F]
    for i in range(5):
        cin, cout = chans[i], chans[i + 1]
        w = nrm((cin, cout), 1 / np.sqrt(cin)) * bn_scale
        b = nrm((1, cout), 0.02) * bn_scale
        if i == 4:                      # conv5 is the big one -> bf16 operand
            w = w.astype(jnp.bfloat16)
        p[f'pf_w{i + 1}'] = w
        p[f'pf_b{i + 1}'] = b
    # NetVLADLoupe (large matmul weights stored bf16; MXU-native, f32 accum)
    p['cluster_w'] = nrm((F, K), 1 / np.sqrt(F)).astype(jnp.bfloat16)
    p['cluster_w2'] = nrm((F, K), 1 / np.sqrt(F))
    p['hidden_w'] = nrm((F * K, D), 1 / np.sqrt(F)).astype(jnp.bfloat16)
    p['bn1_s'] = jnp.full((1, K), bn_scale, jnp.float32)
    p['bn1_b'] = jnp.zeros((1, K), jnp.float32)
    p['bn2_s'] = jnp.full((1, D), bn_scale, jnp.float32)
    p['bn2_b'] = jnp.zeros((1, D), jnp.float32)
    # GatingContext
    p['gating_w'] = nrm((D, D), 1 / np.sqrt(D)).astype(jnp.bfloat16)
    p['gbn_s'] = jnp.full((1, D), bn_scale, jnp.float32)
    p['gbn_b'] = jnp.zeros((1, D), jnp.float32)

    # --- layout permutations precomputed ONCE at weight-load time -------------
    # kernel keeps the VLAD descriptor K-major (lane-dense F last); permute the
    # matching weights here instead of per forward pass.
    p['cluster_w2_kf'] = jnp.transpose(p['cluster_w2'])               # (K, F)
    p['hidden_w_kf'] = (p['hidden_w'].reshape(F, K, D)
                        .transpose(1, 0, 2).reshape(K * F, D))        # k*F+f rows
    return p


# ----------------------------- forward ---------------------------------------
def pointnetvlad_forward(x, p):
    # x: (B, 1, N, 3)  -- PyTorch NCHW conv input (C=1, H=num_points, W=3)
    pts = x[:, 0, :, :]                                     # (B, N, 3)

    # --- STN3d (fully fused: point MLP + max + FC head) in one Pallas call
    t9 = stn(pts, p)[:, 0, :]                               # (B, 9)
    trans = t9.reshape(B, 3, 3) + jnp.eye(3, dtype=jnp.float32)

    # --- fused input-transform-fold + PointNetfeat + NetVLAD core
    vlad = feat_vlad(pts, trans, p)                         # (B, K, F) lane-dense

    # K-major flatten matches p['hidden_w_kf'] (precomputed in make_params)
    flat = vlad.reshape(B, K * F)

    # --- hidden projection (hidden_w streamed once, M = B) + BN2 + gating
    return netvlad_head(flat, p)                            # (B, D)


# ----------------------------- pure-JAX reference ----------------------------
def reference_forward(x, p):
    hp = jax.lax.Precision.HIGHEST
    f32 = lambda a: a.astype(jnp.float32)
    pts = x[:, 0]
    h = jnp.maximum(jnp.dot(pts, p['stn_w1'], precision=hp) + p['stn_b1'], 0)
    h = jnp.maximum(jnp.dot(h, p['stn_w2'], precision=hp) + p['stn_b2'], 0)
    h = jnp.maximum(jnp.dot(h, p['stn_w3'], precision=hp) + p['stn_b3'], 0)
    pooled = jnp.max(h, axis=1)
    g = jnp.maximum(jnp.dot(pooled, p['stn_fc1_w'], precision=hp) + p['stn_fc1_b'], 0)
    g = jnp.maximum(jnp.dot(g, p['stn_fc2_w'], precision=hp) + p['stn_fc2_b'], 0)
    t = jnp.dot(g, p['stn_fc3_w'], precision=hp) + p['stn_fc3_b']
    trans = t.reshape(B, 3, 3) + jnp.eye(3)
    h = jnp.einsum('bnd,bde->bne', pts, trans, precision=hp)
    for i in range(1, 5):
        h = jnp.maximum(jnp.dot(h, p[f'pf_w{i}'], precision=hp) + p[f'pf_b{i}'], 0)
    feat = jnp.dot(h, f32(p['pf_w5']), precision=hp) + p['pf_b5']
    act = jnp.einsum('bnf,fk->bnk', feat, f32(p['cluster_w']), precision=hp)
    act = act * p['bn1_s'] + p['bn1_b']
    act = jax.nn.softmax(act, axis=-1)
    a_sum = jnp.sum(act, axis=1, keepdims=True)
    vlad = jnp.einsum('bnf,bnk->bfk', feat, act, precision=hp)
    vlad = vlad - a_sum * p['cluster_w2'][None]
    vlad = vlad / jnp.maximum(jnp.linalg.norm(vlad, axis=1, keepdims=True), 1e-12)
    flat = vlad.reshape(B, -1)          # torch .view ordering: F-major
    flat = flat / jnp.maximum(jnp.linalg.norm(flat, axis=1, keepdims=True), 1e-12)
    proj = jnp.dot(flat, f32(p['hidden_w']), precision=hp) * p['bn2_s'] + p['bn2_b']
    gates = jnp.dot(proj, f32(p['gating_w']), precision=hp) * p['gbn_s'] + p['gbn_b']
    return proj * jax.nn.sigmoid(gates)


# ----------------------------- main -------------------------------------------
if __name__ == "__main__":
    key = jax.random.PRNGKey(0)
    pkey, xkey = jax.random.split(key)
    params = make_params(pkey)
    x = jax.random.normal(xkey, (B, 1, N, 3), jnp.float32)

    out = pointnetvlad_forward(x, params)
    out = jax.block_until_ready(out)
    assert out.shape == (B, D)

    ref = np.asarray(reference_forward(x, params))
    # bf16 matmul operands in the kernels vs. f32 HIGHEST reference
    np.testing.assert_allclose(np.asarray(out), ref, rtol=3e-2, atol=3e-3)
    print("KERNEL_OK")
</pallas_src>

<mosaic_0001>
module attributes {stable_mosaic.version = 11 : i64} {
  func.func @stn_kernel(%arg0: i32, %arg1: memref<1x128x3xf32, #tpu.memory_space<vmem>>, %arg2: memref<3x32xf32, #tpu.memory_space<vmem>>, %arg3: memref<1x32xf32, #tpu.memory_space<vmem>>, %arg4: memref<32x64xf32, #tpu.memory_space<vmem>>, %arg5: memref<1x64xf32, #tpu.memory_space<vmem>>, %arg6: memref<64x128xf32, #tpu.memory_space<vmem>>, %arg7: memref<1x128xf32, #tpu.memory_space<vmem>>, %arg8: memref<128x64xf32, #tpu.memory_space<vmem>>, %arg9: memref<1x64xf32, #tpu.memory_space<vmem>>, %arg10: memref<64x32xf32, #tpu.memory_space<vmem>>, %arg11: memref<1x32xf32, #tpu.memory_space<vmem>>, %arg12: memref<32x9xf32, #tpu.memory_space<vmem>>, %arg13: memref<1x9xf32, #tpu.memory_space<vmem>>, %arg14: memref<1x1x9xf32, #tpu.memory_space<vmem>>) attributes {dimension_semantics = [#tpu.dimension_semantics<parallel>], iteration_bounds = array<i64: 2>, scalar_prefetch = 0 : i64, scratch_operands = 0 : i64, tpu.core_type = #tpu.core_type<tc>, window_params = [{transform_indices = @transform_0, window_bounds = array<i64: 1, 128, 3>}, {pipeline_mode = #tpu.pipeline_mode<synchronous>, transform_indices = @transform_1, window_bounds = array<i64: 3, 32>}, {pipeline_mode = #tpu.pipeline_mode<synchronous>, transform_indices = @transform_2, window_bounds = array<i64: 1, 32>}, {pipeline_mode = #tpu.pipeline_mode<synchronous>, transform_indices = @transform_3, window_bounds = array<i64: 32, 64>}, {pipeline_mode = #tpu.pipeline_mode<synchronous>, transform_indices = @transform_4, window_bounds = array<i64: 1, 64>}, {pipeline_mode = #tpu.pipeline_mode<synchronous>, transform_indices = @transform_5, window_bounds = array<i64: 64, 128>}, {pipeline_mode = #tpu.pipeline_mode<synchronous>, transform_indices = @transform_6, window_bounds = array<i64: 1, 128>}, {pipeline_mode = #tpu.pipeline_mode<synchronous>, transform_indices = @transform_7, window_bounds = array<i64: 128, 64>}, {pipeline_mode = #tpu.pipeline_mode<synchronous>, transform_indices = @transform_8, window_bounds = array<i64: 1, 64>}, {pipeline_mode = #tpu.pipeline_mode<synchronous>, transform_indices = @transform_9, window_bounds = array<i64: 64, 32>}, {pipeline_mode = #tpu.pipeline_mode<synchronous>, transform_indices = @transform_10, window_bounds = array<i64: 1, 32>}, {pipeline_mode = #tpu.pipeline_mode<synchronous>, transform_indices = @transform_11, window_bounds = array<i64: 32, 9>}, {pipeline_mode = #tpu.pipeline_mode<synchronous>, transform_indices = @transform_12, window_bounds = array<i64: 1, 9>}, {transform_indices = @transform_13, window_bounds = array<i64: 1, 1, 9>}]} {
    %c0 = arith.constant 0 : index
    %c0_0 = arith.constant 0 : index
    %c0_1 = arith.constant 0 : index
    %0 = vector.load %arg1[%c0, %c0_0, %c0_1] : memref<1x128x3xf32, #tpu.memory_space<vmem>>, vector<1x128x3xf32>
    %1 = vector.shape_cast %0 : vector<1x128x3xf32> to vector<128x3xf32>
    %c0_2 = arith.constant 0 : index
    %c0_3 = arith.constant 0 : index
    %2 = vector.load %arg2[%c0_2, %c0_3] : memref<3x32xf32, #tpu.memory_space<vmem>>, vector<3x32xf32>
    %cst = arith.constant dense<0.000000e+00> : vector<128x32xf32>
    %3 = tpu.matmul %1, %2, %cst {dimension_numbers = #tpu.dot_dimension_numbers<[1], [0], [0], [1], [0, 0, 1, 1], [], []>} : vector<128x3xf32>, vector<3x32xf32>, vector<128x32xf32> -> vector<128x32xf32>
    %c0_4 = arith.constant 0 : index
    %c0_5 = arith.constant 0 : index
    %4 = vector.load %arg3[%c0_4, %c0_5] : memref<1x32xf32, #tpu.memory_space<vmem>>, vector<1x32xf32>
    %5 = vector.broadcast %4 : vector<1x32xf32> to vector<128x32xf32>
    %6 = arith.addf %3, %5 : vector<128x32xf32>
    %cst_6 = arith.constant 0.000000e+00 : f32
    %7 = vector.broadcast %cst_6 : f32 to vector<128x32xf32>
    %8 = arith.maximumf %6, %7 : vector<128x32xf32>
    %c0_7 = arith.constant 0 : index
    %c0_8 = arith.constant 0 : index
    %9 = vector.load %arg4[%c0_7, %c0_8] : memref<32x64xf32, #tpu.memory_space<vmem>>, vector<32x64xf32>
    %cst_9 = arith.constant dense<0.000000e+00> : vector<128x64xf32>
    %10 = tpu.matmul %8, %9, %cst_9 {dimension_numbers = #tpu.dot_dimension_numbers<[1], [0], [0], [1], [0, 0, 1, 1], [], []>} : vector<128x32xf32>, vector<32x64xf32>, vector<128x64xf32> -> vector<128x64xf32>
    %c0_10 = arith.constant 0 : index
    %c0_11 = arith.constant 0 : index
    %11 = vector.load %arg5[%c0_10, %c0_11] : memref<1x64xf32, #tpu.memory_space<vmem>>, vector<1x64xf32>
    %12 = vector.broadcast %11 : vector<1x64xf32> to vector<128x64xf32>
    %13 = arith.addf %10, %12 : vector<128x64xf32>
    %cst_12 = arith.constant 0.000000e+00 : f32
    %14 = vector.broadcast %cst_12 : f32 to vector<128x64xf32>
    %15 = arith.maximumf %13, %14 : vector<128x64xf32>
    %c0_13 = arith.constant 0 : index
    %c0_14 = arith.constant 0 : index
    %16 = vector.load %arg6[%c0_13, %c0_14] : memref<64x128xf32, #tpu.memory_space<vmem>>, vector<64x128xf32>
    %cst_15 = arith.constant dense<0.000000e+00> : vector<128x128xf32>
    %17 = tpu.matmul %15, %16, %cst_15 {dimension_numbers = #tpu.dot_dimension_numbers<[1], [0], [0], [1], [0, 0, 1, 1], [], []>} : vector<128x64xf32>, vector<64x128xf32>, vector<128x128xf32> -> vector<128x128xf32>
    %c0_16 = arith.constant 0 : index
    %c0_17 = arith.constant 0 : index
    %18 = vector.load %arg7[%c0_16, %c0_17] : memref<1x128xf32, #tpu.memory_space<vmem>>, vector<1x128xf32>
    %19 = vector.broadcast %18 : vector<1x128xf32> to vector<128x128xf32>
    %20 = arith.addf %17, %19 : vector<128x128xf32>
    %cst_18 = arith.constant 0.000000e+00 : f32
    %21 = vector.broadcast %cst_18 : f32 to vector<128x128xf32>
    %22 = arith.maximumf %20, %21 : vector<128x128xf32>
    %cst_19 = arith.constant dense<0xFF800000> : vector<128xf32>
    %23 = vector.multi_reduction <maximumf>, %22, %cst_19 [0] : vector<128x128xf32> to vector<128xf32>
    %24 = vector.shape_cast %23 : vector<128xf32> to vector<1x128xf32>
    %c0_20 = arith.constant 0 : index
    %c0_21 = arith.constant 0 : index
    %25 = vector.load %arg8[%c0_20, %c0_21] : memref<128x64xf32, #tpu.memory_space<vmem>>, vector<128x64xf32>
    %cst_22 = arith.constant dense<0.000000e+00> : vector<1x64xf32>
    %26 = tpu.matmul %24, %25, %cst_22 {dimension_numbers = #tpu.dot_dimension_numbers<[1], [0], [0], [1], [0, 0, 1, 1], [], []>} : vector<1x128xf32>, vector<128x64xf32>, vector<1x64xf32> -> vector<1x64xf32>
    %c0_23 = arith.constant 0 : index
    %c0_24 = arith.constant 0 : index
    %27 = vector.load %arg9[%c0_23, %c0_24] : memref<1x64xf32, #tpu.memory_space<vmem>>, vector<1x64xf32>
    %28 = arith.addf %26, %27 : vector<1x64xf32>
    %cst_25 = arith.constant 0.000000e+00 : f32
    %29 = vector.broadcast %cst_25 : f32 to vector<1x64xf32>
    %30 = arith.maximumf %28, %29 : vector<1x64xf32>
    %c0_26 = arith.constant 0 : index
    %c0_27 = arith.constant 0 : index
    %31 = vector.load %arg10[%c0_26, %c0_27] : memref<64x32xf32, #tpu.memory_space<vmem>>, vector<64x32xf32>
    %cst_28 = arith.constant dense<0.000000e+00> : vector<1x32xf32>
    %32 = tpu.matmul %30, %31, %cst_28 {dimension_numbers = #tpu.dot_dimension_numbers<[1], [0], [0], [1], [0, 0, 1, 1], [], []>} : vector<1x64xf32>, vector<64x32xf32>, vector<1x32xf32> -> vector<1x32xf32>
    %c0_29 = arith.constant 0 : index
    %c0_30 = arith.constant 0 : index
    %33 = vector.load %arg11[%c0_29, %c0_30] : memref<1x32xf32, #tpu.memory_space<vmem>>, vector<1x32xf32>
    %34 = arith.addf %32, %33 : vector<1x32xf32>
    %cst_31 = arith.constant 0.000000e+00 : f32
    %35 = vector.broadcast %cst_31 : f32 to vector<1x32xf32>
    %36 = arith.maximumf %34, %35 : vector<1x32xf32>
    %c0_32 = arith.constant 0 : index
    %c0_33 = arith.constant 0 : index
    %37 = vector.load %arg12[%c0_32, %c0_33] : memref<32x9xf32, #tpu.memory_space<vmem>>, vector<32x9xf32>
    %cst_34 = arith.constant dense<0.000000e+00> : vector<1x9xf32>
    %38 = tpu.matmul %36, %37, %cst_34 {dimension_numbers = #tpu.dot_dimension_numbers<[1], [0], [0], [1], [0, 0, 1, 1], [], []>} : vector<1x32xf32>, vector<32x9xf32>, vector<1x9xf32> -> vector<1x9xf32>
    %c0_35 = arith.constant 0 : index
    %c0_36 = arith.constant 0 : index
    %39 = vector.load %arg13[%c0_35, %c0_36] : memref<1x9xf32, #tpu.memory_space<vmem>>, vector<1x9xf32>
    %40 = arith.addf %38, %39 : vector<1x9xf32>
    %c0_37 = arith.constant 0 : index
    %c0_38 = arith.constant 0 : index
    %c0_39 = arith.constant 0 : index
    %41 = vector.load %arg14[%c0_37, %c0_38, %c0_39] : memref<1x1x9xf32, #tpu.memory_space<vmem>>, vector<1x1x9xf32>
    %42 = vector.shape_cast %41 : vector<1x1x9xf32> to vector<1x9xf32>
    %43 = vector.shape_cast %40 : vector<1x9xf32> to vector<1x1x9xf32>
    tpu.vector_store %arg14[%c0_37, %c0_38, %c0_39], %43 {strides = array<i32>} : memref<1x1x9xf32, #tpu.memory_space<vmem>>, vector<1x1x9xf32>,
    return
  }
  func.func @transform_0(%arg0: i32) -> (i32, i32, i32) {
    %c0_i32 = arith.constant 0 : i32
    %c0_i32_0 = arith.constant 0 : i32
    %c0_i32_1 = arith.constant 0 : i32
    return %arg0, %c0_i32, %c0_i32_0 : i32, i32, i32
  }
  func.func @transform_1(%arg0: i32) -> (i32, i32) {
    %c0_i32 = arith.constant 0 : i32
    %c0_i32_0 = arith.constant 0 : i32
    %c0_i32_1 = arith.constant 0 : i32
    return %c0_i32, %c0_i32_0 : i32, i32
  }
  func.func @transform_2(%arg0: i32) -> (i32, i32) {
    %c0_i32 = arith.constant 0 : i32
    %c0_i32_0 = arith.constant 0 : i32
    %c0_i32_1 = arith.constant 0 : i32
    return %c0_i32, %c0_i32_0 : i32, i32
  }
  func.func @transform_3(%arg0: i32) -> (i32, i32) {
    %c0_i32 = arith.constant 0 : i32
    %c0_i32_0 = arith.constant 0 : i32
    %c0_i32_1 = arith.constant 0 : i32
    return %c0_i32, %c0_i32_0 : i32, i32
  }
  func.func @transform_4(%arg0: i32) -> (i32, i32) {
    %c0_i32 = arith.constant 0 : i32
    %c0_i32_0 = arith.constant 0 : i32
    %c0_i32_1 = arith.constant 0 : i32
    return %c0_i32, %c0_i32_0 : i32, i32
  }
  func.func @transform_5(%arg0: i32) -> (i32, i32) {
    %c0_i32 = arith.constant 0 : i32
    %c0_i32_0 = arith.constant 0 : i32
    %c0_i32_1 = arith.constant 0 : i32
    return %c0_i32, %c0_i32_0 : i32, i32
  }
  func.func @transform_6(%arg0: i32) -> (i32, i32) {
    %c0_i32 = arith.constant 0 : i32
    %c0_i32_0 = arith.constant 0 : i32
    %c0_i32_1 = arith.constant 0 : i32
    return %c0_i32, %c0_i32_0 : i32, i32
  }
  func.func @transform_7(%arg0: i32) -> (i32, i32) {
    %c0_i32 = arith.constant 0 : i32
    %c0_i32_0 = arith.constant 0 : i32
    %c0_i32_1 = arith.constant 0 : i32
    return %c0_i32, %c0_i32_0 : i32, i32
  }
  func.func @transform_8(%arg0: i32) -> (i32, i32) {
    %c0_i32 = arith.constant 0 : i32
    %c0_i32_0 = arith.constant 0 : i32
    %c0_i32_1 = arith.constant 0 : i32
    return %c0_i32, %c0_i32_0 : i32, i32
  }
  func.func @transform_9(%arg0: i32) -> (i32, i32) {
    %c0_i32 = arith.constant 0 : i32
    %c0_i32_0 = arith.constant 0 : i32
    %c0_i32_1 = arith.constant 0 : i32
    return %c0_i32, %c0_i32_0 : i32, i32
  }
  func.func @transform_10(%arg0: i32) -> (i32, i32) {
    %c0_i32 = arith.constant 0 : i32
    %c0_i32_0 = arith.constant 0 : i32
    %c0_i32_1 = arith.constant 0 : i32
    return %c0_i32, %c0_i32_0 : i32, i32
  }
  func.func @transform_11(%arg0: i32) -> (i32, i32) {
    %c0_i32 = arith.constant 0 : i32
    %c0_i32_0 = arith.constant 0 : i32
    %c0_i32_1 = arith.constant 0 : i32
    return %c0_i32, %c0_i32_0 : i32, i32
  }
  func.func @transform_12(%arg0: i32) -> (i32, i32) {
    %c0_i32 = arith.constant 0 : i32
    %c0_i32_0 = arith.constant 0 : i32
    %c0_i32_1 = arith.constant 0 : i32
    return %c0_i32, %c0_i32_0 : i32, i32
  }
  func.func @transform_13(%arg0: i32) -> (i32, i32, i32) {
    %c0_i32 = arith.constant 0 : i32
    %c0_i32_0 = arith.constant 0 : i32
    %c0_i32_1 = arith.constant 0 : i32
    return %arg0, %c0_i32, %c0_i32_0 : i32, i32, i32
  }
}

</mosaic_0001>

<llo_original>
// kernel: tpu_custom_call.1
$region0: #{tpu_custom_call.1}
  #allocation0 [shape = 'u32[]', space=smem, size = 0x4, offset = 0x4, fixed_abs, tag = 'smem constant byte address 0x4 - core index']
  #allocation1 [shape = 'u32[144,128]{1,0:T(1,128)}', space=vmem, size = 0x12000, scoped, tag = 'internal scratch']
  %s0 = inlined_call_operand.vmem [shape: f32[2,128,3], index: 0, kind: input, shape index: {}]
  %s1 = inlined_call_operand.vmem [shape: f32[3,32], index: 1, kind: input, shape index: {}]
  %s2 = inlined_call_operand.vmem [shape: f32[1,32], index: 2, kind: input, shape index: {}]
  %s3 = inlined_call_operand.vmem [shape: f32[32,64], index: 3, kind: input, shape index: {}]
  %s4 = inlined_call_operand.vmem [shape: f32[1,64], index: 4, kind: input, shape index: {}]
  %s5 = inlined_call_operand.vmem [shape: f32[64,128], index: 5, kind: input, shape index: {}]
  %s6 = inlined_call_operand.vmem [shape: f32[1,128], index: 6, kind: input, shape index: {}]
  %s7 = inlined_call_operand.vmem [shape: f32[128,64], index: 7, kind: input, shape index: {}]
  %s8 = inlined_call_operand.vmem [shape: f32[1,64], index: 8, kind: input, shape index: {}]
  %s9 = inlined_call_operand.vmem [shape: f32[64,32], index: 9, kind: input, shape index: {}]
  %s10 = inlined_call_operand.vmem [shape: f32[1,32], index: 10, kind: input, shape index: {}]
  %s11 = inlined_call_operand.vmem [shape: f32[32,9], index: 11, kind: input, shape index: {}]
  %s12 = inlined_call_operand.vmem [shape: f32[1,9], index: 12, kind: input, shape index: {}]
  %s13 = inlined_call_operand.hbm [shape: f32[2,1,9], index: 13, kind: output, shape index: {}]
  %s14 = sld [smem:[#allocation0]]
  $region85: #{tpu_custom_call.1} parent=0
    _
  %s16 = ssub.s32 1, %s14
  %s17 = scalar_select 0, %s16, %s14
  $region1: #{tpu_custom_call.1} parent=0
    #allocation2 [shape = 'u8[1024]{0}', space=vmem, size = 0x400, scoped, tag = 'output window, operand 0']
    #allocation3 [shape = 's32[2]{0}', space=sflag, size = 0x8, scoped, tag = 'scoped memory for tpu_custom_call.1']
    %18 = vsyncpa [#allocation3], 0
    %s19 = scalar_lea.sflag [#allocation3], 1
    %20 = vsyncpa %s19, 0
    loop: start=0, step=1, limit=4
    $region2: #{tpu_custom_call.1} parent=1 // loop_pre_header
      _
    $region3: #{tpu_custom_call.1} parent=1 // loop_header
      %s22 = sphi 0, %s26
      %p23 = scmp.ge.s32.totalorder %s22, 4
      %s32 = sphi 0, %s34
      %s35 = sphi 0, %s32
      %s36 = sphi 0, %s35
      %s52 = sphi 0, %s36
      %s56 = sphi 0, %s56
      %s58 = sphi 0, %s56
      %s59 = sphi 0, %s58
      %s73 = sphi 0, %s59
      %s77 = sphi 0, %s77
      %s79 = sphi 0, %s77
      %s80 = sphi 0, %s79
      %s94 = sphi 0, %s80
      %s98 = sphi 0, %s98
      %s100 = sphi 0, %s98
      %s101 = sphi 0, %s100
      %s115 = sphi 0, %s101
      %s119 = sphi 0, %s119
      %s121 = sphi 0, %s119
      %s122 = sphi 0, %s121
      %s136 = sphi 0, %s122
      %s140 = sphi 0, %s140
      %s142 = sphi 0, %s140
      %s143 = sphi 0, %s142
      %s157 = sphi 0, %s143
      %s161 = sphi 0, %s161
      %s163 = sphi 0, %s161
      %s164 = sphi 0, %s163
      %s178 = sphi 0, %s164
      %s182 = sphi 0, %s182
      %s184 = sphi 0, %s182
      %s185 = sphi 0, %s184
      %s199 = sphi 0, %s185
      %s203 = sphi 0, %s203
      %s205 = sphi 0, %s203
      %s206 = sphi 0, %s205
      %s220 = sphi 0, %s206
      %s224 = sphi 0, %s224
      %s226 = sphi 0, %s224
      %s227 = sphi 0, %s226
      %s241 = sphi 0, %s227
      %s245 = sphi 0, %s245
      %s247 = sphi 0, %s245
      %s248 = sphi 0, %s247
      %s262 = sphi 0, %s248
      %s266 = sphi 0, %s266
      %s268 = sphi 0, %s266
      %s269 = sphi 0, %s268
      %s283 = sphi 0, %s269
      %s287 = sphi 0, %s287
      %s289 = sphi 0, %s287
      %s290 = sphi 0, %s289
      %s304 = sphi 0, %s290
      %s310 = sphi 0, %s312
      %s313 = sphi 0, %s310
      %s314 = sphi 0, %s313
      %s330 = sphi 0, %s314
    $region4: #{tpu_custom_call.1} parent=1 // loop_header_branch
      %25 = sbr.rel (%p23) target = $region8
    $region5: #{tpu_custom_call.1} parent=1 // loop_body
      %s27 = ssub.s32 %s22, 1
      %s28 = ssub.s32 %s22, 2
      %s29 = sadd.s32 %s22, 1
      %s30 = ssub.s32 %s22, %s29
      %p31 = scmp.eq.s32.totalorder %s30, 0
      %s33 = sadd.s32 %s32, 1
      %s34 = scalar_select %p31, %s32, %s33
      %p37 = pneg %p31
      %p38 = scmp.eq.s32.totalorder %s22, 1
      %p39 = por %p37, %p38
      %p40 = scmp.ne.s32.totalorder %s32, %s35
      %p41 = scmp.eq.s32.totalorder %s22, 0
      %p42 = por %p40, %p41
      %p43 = scmp.ne.s32.totalorder %s32, %s35
      %p44 = scmp.eq.s32.totalorder %s27, 1
      %p45 = por %p43, %p44
      %p46 = scmp.ne.s32.totalorder %s35, %s36
      %p47 = scmp.eq.s32.totalorder %s27, 0
      %p48 = por %p46, %p47
      %p49 = scmp.ne.s32.totalorder %s35, %s36
      %p50 = scmp.eq.s32.totalorder %s28, 1
      %p51 = por %p49, %p50
      %p53 = scmp.ne.s32.totalorder %s36, %s52
      %p54 = scmp.eq.s32.totalorder %s28, 0
      %p55 = por %p53, %p54
      %s57 = sadd.s32 %s56, 1
      %p60 = scmp.eq.s32.totalorder %s22, 1
      %p61 = scmp.ne.s32.totalorder %s56, %s58
      %p62 = scmp.eq.s32.totalorder %s22, 0
      %p63 = por %p61, %p62
      %p64 = scmp.ne.s32.totalorder %s56, %s58
      %p65 = scmp.eq.s32.totalorder %s27, 1
      %p66 = por %p64, %p65
      %p67 = scmp.ne.s32.totalorder %s58, %s59
      %p68 = scmp.eq.s32.totalorder %s27, 0
      %p69 = por %p67, %p68
      %p70 = scmp.ne.s32.totalorder %s58, %s59
      %p71 = scmp.eq.s32.totalorder %s28, 1
      %p72 = por %p70, %p71
      %p74 = scmp.ne.s32.totalorder %s59, %s73
      %p75 = scmp.eq.s32.totalorder %s28, 0
      %p76 = por %p74, %p75
      %s78 = sadd.s32 %s77, 1
      %p81 = scmp.eq.s32.totalorder %s22, 1
      %p82 = scmp.ne.s32.totalorder %s77, %s79
      %p83 = scmp.eq.s32.totalorder %s22, 0
      %p84 = por %p82, %p83
      %p85 = scmp.ne.s32.totalorder %s77, %s79
      %p86 = scmp.eq.s32.totalorder %s27, 1
      %p87 = por %p85, %p86
      %p88 = scmp.ne.s32.totalorder %s79, %s80
      %p89 = scmp.eq.s32.totalorder %s27, 0
      %p90 = por %p88, %p89
      %p91 = scmp.ne.s32.totalorder %s79, %s80
      %p92 = scmp.eq.s32.totalorder %s28, 1
      %p93 = por %p91, %p92
      %p95 = scmp.ne.s32.totalorder %s80, %s94
      %p96 = scmp.eq.s32.totalorder %s28, 0
      %p97 = por %p95, %p96
      %s99 = sadd.s32 %s98, 1
      %p102 = scmp.eq.s32.totalorder %s22, 1
      %p103 = scmp.ne.s32.totalorder %s98, %s100
      %p104 = scmp.eq.s32.totalorder %s22, 0
      %p105 = por %p103, %p104
      %p106 = scmp.ne.s32.totalorder %s98, %s100
      %p107 = scmp.eq.s32.totalorder %s27, 1
      %p108 = por %p106, %p107
      %p109 = scmp.ne.s32.totalorder %s100, %s101
      %p110 = scmp.eq.s32.totalorder %s27, 0
      %p111 = por %p109, %p110
      %p112 = scmp.ne.s32.totalorder %s100, %s101
      %p113 = scmp.eq.s32.totalorder %s28, 1
      %p114 = por %p112, %p113
      %p116 = scmp.ne.s32.totalorder %s101, %s115
      %p117 = scmp.eq.s32.totalorder %s28, 0
      %p118 = por %p116, %p117
      %s120 = sadd.s32 %s119, 1
      %p123 = scmp.eq.s32.totalorder %s22, 1
      %p124 = scmp.ne.s32.totalorder %s119, %s121
      %p125 = scmp.eq.s32.totalorder %s22, 0
      %p126 = por %p124, %p125
      %p127 = scmp.ne.s32.totalorder %s119, %s121
      %p128 = scmp.eq.s32.totalorder %s27, 1
      %p129 = por %p127, %p128
      %p130 = scmp.ne.s32.totalorder %s121, %s122
      %p131 = scmp.eq.s32.totalorder %s27, 0
      %p132 = por %p130, %p131
      %p133 = scmp.ne.s32.totalorder %s121, %s122
      %p134 = scmp.eq.s32.totalorder %s28, 1
      %p135 = por %p133, %p134
      %p137 = scmp.ne.s32.totalorder %s122, %s136
      %p138 = scmp.eq.s32.totalorder %s28, 0
      %p139 = por %p137, %p138
      %s141 = sadd.s32 %s140, 1
      %p144 = scmp.eq.s32.totalorder %s22, 1
      %p145 = scmp.ne.s32.totalorder %s140, %s142
      %p146 = scmp.eq.s32.totalorder %s22, 0
      %p147 = por %p145, %p146
      %p148 = scmp.ne.s32.totalorder %s140, %s142
      %p149 = scmp.eq.s32.totalorder %s27, 1
      %p150 = por %p148, %p149
      %p151 = scmp.ne.s32.totalorder %s142, %s143
      %p152 = scmp.eq.s32.totalorder %s27, 0
      %p153 = por %p151, %p152
      %p154 = scmp.ne.s32.totalorder %s142, %s143
      %p155 = scmp.eq.s32.totalorder %s28, 1
      %p156 = por %p154, %p155
      %p158 = scmp.ne.s32.totalorder %s143, %s157
      %p159 = scmp.eq.s32.totalorder %s28, 0
      %p160 = por %p158, %p159
      %s162 = sadd.s32 %s161, 1
      %p165 = scmp.eq.s32.totalorder %s22, 1
      %p166 = scmp.ne.s32.totalorder %s161, %s163
      %p167 = scmp.eq.s32.totalorder %s22, 0
      %p168 = por %p166, %p167
      %p169 = scmp.ne.s32.totalorder %s161, %s163
      %p170 = scmp.eq.s32.totalorder %s27, 1
      %p171 = por %p169, %p170
      %p172 = scmp.ne.s32.totalorder %s163, %s164
      %p173 = scmp.eq.s32.totalorder %s27, 0
      %p174 = por %p172, %p173
      %p175 = scmp.ne.s32.totalorder %s163, %s164
      %p176 = scmp.eq.s32.totalorder %s28, 1
      %p177 = por %p175, %p176
      %p179 = scmp.ne.s32.totalorder %s164, %s178
      %p180 = scmp.eq.s32.totalorder %s28, 0
      %p181 = por %p179, %p180
      %s183 = sadd.s32 %s182, 1
      %p186 = scmp.eq.s32.totalorder %s22, 1
      %p187 = scmp.ne.s32.totalorder %s182, %s184
      %p188 = scmp.eq.s32.totalorder %s22, 0
      %p189 = por %p187, %p188
      %p190 = scmp.ne.s32.totalorder %s182, %s184
      %p191 = scmp.eq.s32.totalorder %s27, 1
      %p192 = por %p190, %p191
      %p193 = scmp.ne.s32.totalorder %s184, %s185
      %p194 = scmp.eq.s32.totalorder %s27, 0
      %p195 = por %p193, %p194
      %p196 = scmp.ne.s32.totalorder %s184, %s185
      %p197 = scmp.eq.s32.totalorder %s28, 1
      %p198 = por %p196, %p197
      %p200 = scmp.ne.s32.totalorder %s185, %s199
      %p201 = scmp.eq.s32.totalorder %s28, 0
      %p202 = por %p200, %p201
      %s204 = sadd.s32 %s203, 1
      %p207 = scmp.eq.s32.totalorder %s22, 1
      %p208 = scmp.ne.s32.totalorder %s203, %s205
      %p209 = scmp.eq.s32.totalorder %s22, 0
      %p210 = por %p208, %p209
      %p211 = scmp.ne.s32.totalorder %s203, %s205
      %p212 = scmp.eq.s32.totalorder %s27, 1
      %p213 = por %p211, %p212
      %p214 = scmp.ne.s32.totalorder %s205, %s206
      %p215 = scmp.eq.s32.totalorder %s27, 0
      %p216 = por %p214, %p215
      %p217 = scmp.ne.s32.totalorder %s205, %s206
      %p218 = scmp.eq.s32.totalorder %s28, 1
      %p219 = por %p217, %p218
      %p221 = scmp.ne.s32.totalorder %s206, %s220
      %p222 = scmp.eq.s32.totalorder %s28, 0
      %p223 = por %p221, %p222
      %s225 = sadd.s32 %s224, 1
      %p228 = scmp.eq.s32.totalorder %s22, 1
      %p229 = scmp.ne.s32.totalorder %s224, %s226
      %p230 = scmp.eq.s32.totalorder %s22, 0
      %p231 = por %p229, %p230
      %p232 = scmp.ne.s32.totalorder %s224, %s226
      %p233 = scmp.eq.s32.totalorder %s27, 1
      %p234 = por %p232, %p233
      %p235 = scmp.ne.s32.totalorder %s226, %s227
      %p236 = scmp.eq.s32.totalorder %s27, 0
      %p237 = por %p235, %p236
      %p238 = scmp.ne.s32.totalorder %s226, %s227
      %p239 = scmp.eq.s32.totalorder %s28, 1
      %p240 = por %p238, %p239
      %p242 = scmp.ne.s32.totalorder %s227, %s241
      %p243 = scmp.eq.s32.totalorder %s28, 0
      %p244 = por %p242, %p243
      %s246 = sadd.s32 %s245, 1
      %p249 = scmp.eq.s32.totalorder %s22, 1
      %p250 = scmp.ne.s32.totalorder %s245, %s247
      %p251 = scmp.eq.s32.totalorder %s22, 0
      %p252 = por %p250, %p251
      %p253 = scmp.ne.s32.totalorder %s245, %s247
      %p254 = scmp.eq.s32.totalorder %s27, 1
      %p255 = por %p253, %p254
      %p256 = scmp.ne.s32.totalorder %s247, %s248
      %p257 = scmp.eq.s32.totalorder %s27, 0
      %p258 = por %p256, %p257
      %p259 = scmp.ne.s32.totalorder %s247, %s248
      %p260 = scmp.eq.s32.totalorder %s28, 1
      %p261 = por %p259, %p260
      %p263 = scmp.ne.s32.totalorder %s248, %s262
      %p264 = scmp.eq.s32.totalorder %s28, 0
      %p265 = por %p263, %p264
      %s267 = sadd.s32 %s266, 1
      %p270 = scmp.eq.s32.totalorder %s22, 1
      %p271 = scmp.ne.s32.totalorder %s266, %s268
      %p272 = scmp.eq.s32.totalorder %s22, 0
      %p273 = por %p271, %p272
      %p274 = scmp.ne.s32.totalorder %s266, %s268
      %p275 = scmp.eq.s32.totalorder %s27, 1
      %p276 = por %p274, %p275
      %p277 = scmp.ne.s32.totalorder %s268, %s269
      %p278 = scmp.eq.s32.totalorder %s27, 0
      %p279 = por %p277, %p278
      %p280 = scmp.ne.s32.totalorder %s268, %s269
      %p281 = scmp.eq.s32.totalorder %s28, 1
      %p282 = por %p280, %p281
      %p284 = scmp.ne.s32.totalorder %s269, %s283
      %p285 = scmp.eq.s32.totalorder %s28, 0
      %p286 = por %p284, %p285
      %s288 = sadd.s32 %s287, 1
      %p291 = scmp.eq.s32.totalorder %s22, 1
      %p292 = scmp.ne.s32.totalorder %s287, %s289
      %p293 = scmp.eq.s32.totalorder %s22, 0
      %p294 = por %p292, %p293
      %p295 = scmp.ne.s32.totalorder %s287, %s289
      %p296 = scmp.eq.s32.totalorder %s27, 1
      %p297 = por %p295, %p296
      %p298 = scmp.ne.s32.totalorder %s289, %s290
      %p299 = scmp.eq.s32.totalorder %s27, 0
      %p300 = por %p298, %p299
      %p301 = scmp.ne.s32.totalorder %s289, %s290
      %p302 = scmp.eq.s32.totalorder %s28, 1
      %p303 = por %p301, %p302
      %p305 = scmp.ne.s32.totalorder %s290, %s304
      %p306 = scmp.eq.s32.totalorder %s28, 0
      %p307 = por %p305, %p306
      %s308 = ssub.s32 %s22, %s29
      %p309 = scmp.eq.s32.totalorder %s308, 0
      %s311 = sadd.s32 %s310, 1
      %s312 = scalar_select %p309, %s310, %s311
      %p315 = pneg %p309
      %p316 = scmp.eq.s32.totalorder %s22, 1
      %p317 = por %p315, %p316
      %p318 = scmp.ne.s32.totalorder %s310, %s313
      %p319 = scmp.eq.s32.totalorder %s22, 0
      %p320 = por %p318, %p319
      %p321 = scmp.ne.s32.totalorder %s310, %s313
      %p322 = scmp.eq.s32.totalorder %s27, 1
      %p323 = por %p321, %p322
      %p324 = scmp.ne.s32.totalorder %s313, %s314
      %p325 = scmp.eq.s32.totalorder %s27, 0
      %p326 = por %p324, %p325
      %p327 = scmp.ne.s32.totalorder %s313, %s314
      %p328 = scmp.eq.s32.totalorder %s28, 1
      %p329 = por %p327, %p328
      %p331 = scmp.ne.s32.totalorder %s314, %s330
      %p332 = scmp.eq.s32.totalorder %s28, 0
      %p333 = por %p331, %p332
      %p334 = scmp.le.s32.totalorder 1, %s22
      %p335 = scmp.lt.s32.totalorder %s22, 3
      %p336 = pnand %p334, %p335
      %p337 = pneg %p336
      // Predicated region
      $region9: #{tpu_custom_call.1} parent=5 // pred_check
        _
      $region10: #{tpu_custom_call.1} parent=5 // pred_check_branch
        %339 = sbr.rel (%p336) target = $region12
      $region11: #{tpu_custom_call.1} parent=5 // pred_region
        %s340 = ssub.s32 %s22, 1
        // Predicated region
        $region13: #{tpu_custom_call.1} parent=11 // pred_check
          %p341 = pneg %p69
        $region14: #{tpu_custom_call.1} parent=11 // pred_check_branch
          %343 = sbr.rel (%p341) target = $region16
        $region15: #{tpu_custom_call.1} parent=11 // pred_region
          _
        $region16: #{tpu_custom_call.1} parent=11 // pred_fallthru
          _
        // Predicated region
        $region17: #{tpu_custom_call.1} parent=11 // pred_check
          %p344 = pneg %p90
        $region18: #{tpu_custom_call.1} parent=11 // pred_check_branch
          %346 = sbr.rel (%p344) target = $region20
        $region19: #{tpu_custom_call.1} parent=11 // pred_region
          _
        $region20: #{tpu_custom_call.1} parent=11 // pred_fallthru
          _
        // Predicated region
        $region21: #{tpu_custom_call.1} parent=11 // pred_check
          %p347 = pneg %p111
        $region22: #{tpu_custom_call.1} parent=11 // pred_check_branch
          %349 = sbr.rel (%p347) target = $region24
        $region23: #{tpu_custom_call.1} parent=11 // pred_region
          _
        $region24: #{tpu_custom_call.1} parent=11 // pred_fallthru
          _
        // Predicated region
        $region25: #{tpu_custom_call.1} parent=11 // pred_check
          %p350 = pneg %p132
        $region26: #{tpu_custom_call.1} parent=11 // pred_check_branch
          %352 = sbr.rel (%p350) target = $region28
        $region27: #{tpu_custom_call.1} parent=11 // pred_region
          _
        $region28: #{tpu_custom_call.1} parent=11 // pred_fallthru
          _
        // Predicated region
        $region29: #{tpu_custom_call.1} parent=11 // pred_check
          %p353 = pneg %p153
        $region30: #{tpu_custom_call.1} parent=11 // pred_check_branch
          %355 = sbr.rel (%p353) target = $region32
        $region31: #{tpu_custom_call.1} parent=11 // pred_region
          _
        $region32: #{tpu_custom_call.1} parent=11 // pred_fallthru
          _
        // Predicated region
        $region33: #{tpu_custom_call.1} parent=11 // pred_check
          %p356 = pneg %p174
        $region34: #{tpu_custom_call.1} parent=11 // pred_check_branch
          %358 = sbr.rel (%p356) target = $region36
        $region35: #{tpu_custom_call.1} parent=11 // pred_region
          _
        $region36: #{tpu_custom_call.1} parent=11 // pred_fallthru
          _
        // Predicated region
        $region37: #{tpu_custom_call.1} parent=11 // pred_check
          %p359 = pneg %p195
        $region38: #{tpu_custom_call.1} parent=11 // pred_check_branch
          %361 = sbr.rel (%p359) target = $region40
        $region39: #{tpu_custom_call.1} parent=11 // pred_region
          _
        $region40: #{tpu_custom_call.1} parent=11 // pred_fallthru
          _
        // Predicated region
        $region41: #{tpu_custom_call.1} parent=11 // pred_check
          %p362 = pneg %p216
        $region42: #{tpu_custom_call.1} parent=11 // pred_check_branch
          %364 = sbr.rel (%p362) target = $region44
        $region43: #{tpu_custom_call.1} parent=11 // pred_region
          _
        $region44: #{tpu_custom_call.1} parent=11 // pred_fallthru
          _
        // Predicated region
        $region45: #{tpu_custom_call.1} parent=11 // pred_check
          %p365 = pneg %p237
        $region46: #{tpu_custom_call.1} parent=11 // pred_check_branch
          %367 = sbr.rel (%p365) target = $region48
        $region47: #{tpu_custom_call.1} parent=11 // pred_region
          _
        $region48: #{tpu_custom_call.1} parent=11 // pred_fallthru
          _
        // Predicated region
        $region49: #{tpu_custom_call.1} parent=11 // pred_check
          %p368 = pneg %p258
        $region50: #{tpu_custom_call.1} parent=11 // pred_check_branch
          %370 = sbr.rel (%p368) target = $region52
        $region51: #{tpu_custom_call.1} parent=11 // pred_region
          _
        $region52: #{tpu_custom_call.1} parent=11 // pred_fallthru
          _
        // Predicated region
        $region53: #{tpu_custom_call.1} parent=11 // pred_check
          %p371 = pneg %p279
        $region54: #{tpu_custom_call.1} parent=11 // pred_check_branch
          %373 = sbr.rel (%p371) target = $region56
        $region55: #{tpu_custom_call.1} parent=11 // pred_region
          _
        $region56: #{tpu_custom_call.1} parent=11 // pred_fallthru
          _
        // Predicated region
        $region57: #{tpu_custom_call.1} parent=11 // pred_check
          %p374 = pneg %p300
        $region58: #{tpu_custom_call.1} parent=11 // pred_check_branch
          %376 = sbr.rel (%p374) target = $region60
        $region59: #{tpu_custom_call.1} parent=11 // pred_region
          _
        $region60: #{tpu_custom_call.1} parent=11 // pred_fallthru
          _
      $region12: #{tpu_custom_call.1} parent=5 // pred_fallthru
        _
      %p377 = scmp.lt.s32.totalorder %s22, 2
      // Predicated region
      $region61: #{tpu_custom_call.1} parent=5 // pred_check
        %p378 = pneg %p377
      $region62: #{tpu_custom_call.1} parent=5 // pred_check_branch
        %380 = sbr.rel (%p378) target = $region64
      $region63: #{tpu_custom_call.1} parent=5 // pred_region
        // Predicated region
        $region65: #{tpu_custom_call.1} parent=63 // pred_check
          %p381 = pneg %p42
        $region66: #{tpu_custom_call.1} parent=63 // pred_check_branch
          %383 = sbr.rel (%p381) target = $region68
        $region67: #{tpu_custom_call.1} parent=63 // pred_region
          %p384 = scmp.lt.s32.totalorder %s22, 1
          %s385 = scalar_select %p384, %s22, 1
          %s386 = smul.addr %s385, 16
          %s387 = smul.addr %s386, 8
          %s388 = scalar_lea.vmem %s0, %s387
        $region68: #{tpu_custom_call.1} parent=63 // pred_fallthru
          _
      $region64: #{tpu_custom_call.1} parent=5 // pred_fallthru
        _
      %p389 = scmp.le.s32.totalorder 1, %s22
      %p390 = scmp.lt.s32.totalorder %s22, 3
      %p391 = pnand %p389, %p390
      %p392 = pneg %p391
      // Predicated region
      $region69: #{tpu_custom_call.1} parent=5 // pred_check
        _
      $region70: #{tpu_custom_call.1} parent=5 // pred_check_branch
        %394 = sbr.rel (%p391) target = $region72
      $region71: #{tpu_custom_call.1} parent=5 // pred_region
        %s395 = ssub.s32 %s22, 1
        %p396 = scmp.lt.s32.totalorder %s27, 1
        %s397 = scalar_select %p396, %s27, 1
        %s398 = smul.addr %s397, 16
        %s399 = smul.addr %s398, 8
        %s400 = scalar_lea.vmem %s0, %s399
        %p401 = pneg %p48
        %p402 = pneg %p45
        %p403 = pneg %p69
        %p404 = pneg %p66
        %p405 = pneg %p90
        %p406 = pneg %p87
        %p407 = pneg %p111
        %p408 = pneg %p108
        %p409 = pneg %p132
        %p410 = pneg %p129
        %p411 = pneg %p153
        %p412 = pneg %p150
        %p413 = pneg %p174
        %p414 = pneg %p171
        %p415 = pneg %p195
        %p416 = pneg %p192
        %p417 = pneg %p216
        %p418 = pneg %p213
        %p419 = pneg %p237
        %p420 = pneg %p234
        %p421 = pneg %p258
        %p422 = pneg %p255
        %p423 = pneg %p279
        %p424 = pneg %p276
        %p425 = pneg %p300
        %p426 = pneg %p297
        %p427 = pneg %p326
        %p428 = pneg %p323
        %s429 = sand.u32 %s313, 1
        %s430 = scalar_lea.sflag [#allocation3], %s429
        %s431 = sand.u32 %s313, 1
        %s432 = scalar_lea.vmem [#allocation2], %s431
        %p433 = scmp.lt.s32.totalorder %s27, 1
        %s434 = scalar_select %p433, %s27, 1
        %s435 = smul.addr %s434, 16
        %s436 = smul.addr %s435, 8
        %s437 = scalar_lea.vmem %s0, %s436
        %v438 = vld [vmem:[%s437] sm:$0xff]
        %v439 = vld [vmem:[%s437 + $0x8] sm:$0xff]
        %v440 = vld [vmem:[%s437 + $0x10] sm:$0xff]
        %v441 = vld [vmem:[%s437 + $0x18] sm:$0xff]
        %v442 = vld [vmem:[%s437 + $0x20] sm:$0xff]
        %v443 = vld [vmem:[%s437 + $0x28] sm:$0xff]
        %v444 = vld [vmem:[%s437 + $0x30] sm:$0xff]
        %v445 = vld [vmem:[%s437 + $0x38] sm:$0xff]
        %v446 = vld [vmem:[%s437 + $0x40] sm:$0xff]
        %v447 = vld [vmem:[%s437 + $0x48] sm:$0xff]
        %v448 = vld [vmem:[%s437 + $0x50] sm:$0xff]
        %v449 = vld [vmem:[%s437 + $0x58] sm:$0xff]
        %v450 = vld [vmem:[%s437 + $0x60] sm:$0xff]
        %v451 = vld [vmem:[%s437 + $0x68] sm:$0xff]
        %v452 = vld [vmem:[%s437 + $0x70] sm:$0xff]
        %v453 = vld [vmem:[%s437 + $0x78] sm:$0xff]
        %v454 = vld [vmem:[%s1] sm:$0x7]
        %v455 = vld [vmem:[%s2] sm:$0x1]
        %v457 = vlaneseq
        %v458 = vshrl.u32 %v457, 7
        %v459 = vsub.s32 0, %v458
        %v460 = vrot.slane %v455, %v459
        %vm462 = vcmask 23552
        %v464 = vsel %vm462, %v438, 0
        %v467 = vsel %vm462, %v439, 0
        %v470 = vsel %vm462, %v440, 0
        %v473 = vsel %vm462, %v441, 0
        %v476 = vsel %vm462, %v442, 0
        %v479 = vsel %vm462, %v443, 0
        %v482 = vsel %vm462, %v444, 0
        %v485 = vsel %vm462, %v445, 0
        %v488 = vsel %vm462, %v446, 0
        %v491 = vsel %vm462, %v447, 0
        %v494 = vsel %vm462, %v448, 0
        %v497 = vsel %vm462, %v449, 0
        %v500 = vsel %vm462, %v450, 0
        %v503 = vsel %vm462, %v451, 0
        %v506 = vsel %vm462, %v452, 0
        %v509 = vsel %vm462, %v453, 0
        %vm511 = vcmask 1042432
        %v513 = vsel %vm511, %v454, 0
        %515 = vmatprep.subr.mxu0 0.0
        %516 = vmatpush1.msra.mxu0 %v513
        %517 = vmatprep.subr.mxu0 0.0
        %518 = vmatpush1.msra.mxu0 0.0
        %519 = vmatprep.subr.mxu0 0.0
        %520 = vmatpush1.msra.mxu0 0.0
        %521 = vmatprep.subr.mxu0 0.0
        %522 = vmatpush1.msra.mxu0 0.0
        %523 = vmatprep.subr.mxu0 0.0
        %524 = vmatpush1.msra.mxu0 0.0
        %525 = vmatprep.subr.mxu0 0.0
        %526 = vmatpush1.msra.mxu0 0.0
        %527 = vmatprep.subr.mxu0 0.0
        %528 = vmatpush1.msra.mxu0 0.0
        %529 = vmatprep.subr.mxu0 0.0
        %530 = vmatpush1.msra.mxu0 0.0
        %531 = vmatprep.subr.mxu0 0.0
        %532 = vmatpush1.msra.mxu0 0.0
        %533 = vmatprep.subr.mxu0 0.0
        %534 = vmatpush1.msra.mxu0 0.0
        %535 = vmatprep.subr.mxu0 0.0
        %536 = vmatpush1.msra.mxu0 0.0
        %537 = vmatprep.subr.mxu0 0.0
        %538 = vmatpush1.msra.mxu0 0.0
        %539 = vmatprep.subr.mxu0 0.0
        %540 = vmatpush1.msra.mxu0 0.0
        %541 = vmatprep.subr.mxu0 0.0
        %542 = vmatpush1.msra.mxu0 0.0
        %543 = vmatprep.subr.mxu0 0.0
        %544 = vmatpush1.msra.mxu0 0.0
        %545 = vmatprep.subr.mxu0 0.0
        %546 = vmatpush1.msra.mxu0 0.0
        %547 = vmatprep.subr.mxu0 0.0
        %548 = vmatpush1.msra.mxu0 0.0
        %549 = vmatprep.subr.mxu0 0.0
        %550 = vmatpush1.msra.mxu0 0.0
        %551 = vmatprep.subr.mxu0 0.0
        %552 = vmatpush1.msra.mxu0 0.0
        %553 = vmatprep.subr.mxu0 0.0
        %554 = vmatpush1.msra.mxu0 0.0
        %555 = vmatprep.subr.mxu0 0.0
        %556 = vmatpush1.msra.mxu0 0.0
        %557 = vmatprep.subr.mxu0 0.0
        %558 = vmatpush1.msra.mxu0 0.0
        %559 = vmatprep.subr.mxu0 0.0
        %560 = vmatpush1.msra.mxu0 0.0
        %561 = vmatprep.subr.mxu0 0.0
        %562 = vmatpush1.msra.mxu0 0.0
        %563 = vmatprep.subr.mxu0 0.0
        %564 = vmatpush1.msra.mxu0 0.0
        %565 = vmatprep.subr.mxu0 0.0
        %566 = vmatpush1.msra.mxu0 0.0
        %567 = vmatprep.subr.mxu0 0.0
        %568 = vmatpush1.msra.mxu0 0.0
        %569 = vmatprep.subr.mxu0 0.0
        %570 = vmatpush1.msra.mxu0 0.0
        %571 = vmatprep.subr.mxu0 0.0
        %572 = vmatpush1.msra.mxu0 0.0
        %573 = vmatprep.subr.mxu0 0.0
        %574 = vmatpush1.msra.mxu0 0.0
        %575 = vmatprep.subr.mxu0 0.0
        %576 = vmatpush1.msra.mxu0 0.0
        %577 = vmatprep.subr.mxu0 0.0
        %578 = vmatpush1.msra.mxu0 0.0
        %579 = vmatprep.mubr.f32.mxu0 0.0
        %580 = vmatmul.mubr.f32.gmra.mrb[0].mxu0 %v464
        %v581 = vpop.f32.mrb[0].mxu0
        %v582 = vadd.f32 %v460, %v581
        %v583 = vpop.f32.mrb[0].mxu0
        %584 = vmatprep.mubr.f32.mxu0 0.0
        %585 = vmatmul.mubr.f32.gmra.mrb[0].mxu0 %v467
        %v586 = vpop.f32.mrb[0].mxu0
        %v587 = vadd.f32 %v460, %v586
        %v588 = vpop.f32.mrb[0].mxu0
        %589 = vmatprep.mubr.f32.mxu0 0.0
        %590 = vmatmul.mubr.f32.gmra.mrb[0].mxu0 %v470
        %v591 = vpop.f32.mrb[0].mxu0
        %v592 = vadd.f32 %v460, %v591
        %v593 = vpop.f32.mrb[0].mxu0
        %594 = vmatprep.mubr.f32.mxu0 0.0
        %595 = vmatmul.mubr.f32.gmra.mrb[0].mxu0 %v473
        %v596 = vpop.f32.mrb[0].mxu0
        %v597 = vadd.f32 %v460, %v596
        %v598 = vpop.f32.mrb[0].mxu0
        %599 = vmatprep.mubr.f32.mxu0 0.0
        %600 = vmatmul.mubr.f32.gmra.mrb[0].mxu0 %v476
        %v601 = vpop.f32.mrb[0].mxu0
        %v602 = vadd.f32 %v460, %v601
        %v603 = vpop.f32.mrb[0].mxu0
        %604 = vmatprep.mubr.f32.mxu0 0.0
        %605 = vmatmul.mubr.f32.gmra.mrb[0].mxu0 %v479
        %v606 = vpop.f32.mrb[0].mxu0
        %v607 = vadd.f32 %v460, %v606
        %v608 = vpop.f32.mrb[0].mxu0
        %609 = vmatprep.mubr.f32.mxu0 0.0
        %610 = vmatmul.mubr.f32.gmra.mrb[0].mxu0 %v482
        %v611 = vpop.f32.mrb[0].mxu0
        %v612 = vadd.f32 %v460, %v611
        %v613 = vpop.f32.mrb[0].mxu0
        %614 = vmatprep.mubr.f32.mxu0 0.0
        %615 = vmatmul.mubr.f32.gmra.mrb[0].mxu0 %v485
        %v616 = vpop.f32.mrb[0].mxu0
        %v617 = vadd.f32 %v460, %v616
        %v618 = vpop.f32.mrb[0].mxu0
        %619 = vmatprep.mubr.f32.mxu0 0.0
        %620 = vmatmul.mubr.f32.gmra.mrb[0].mxu0 %v488
        %v621 = vpop.f32.mrb[0].mxu0
        %v622 = vadd.f32 %v460, %v621
        %v623 = vpop.f32.mrb[0].mxu0
        %624 = vmatprep.mubr.f32.mxu0 0.0
        %625 = vmatmul.mubr.f32.gmra.mrb[0].mxu0 %v491
        %v626 = vpop.f32.mrb[0].mxu0
        %v627 = vadd.f32 %v460, %v626
        %v628 = vpop.f32.mrb[0].mxu0
        %629 = vmatprep.mubr.f32.mxu0 0.0
        %630 = vmatmul.mubr.f32.gmra.mrb[0].mxu0 %v494
        %v631 = vpop.f32.mrb[0].mxu0
        %v632 = vadd.f32 %v460, %v631
        %v633 = vpop.f32.mrb[0].mxu0
        %634 = vmatprep.mubr.f32.mxu0 0.0
        %635 = vmatmul.mubr.f32.gmra.mrb[0].mxu0 %v497
        %v636 = vpop.f32.mrb[0].mxu0
        %v637 = vadd.f32 %v460, %v636
        %v638 = vpop.f32.mrb[0].mxu0
        %639 = vmatprep.mubr.f32.mxu0 0.0
        %640 = vmatmul.mubr.f32.gmra.mrb[0].mxu0 %v500
        %v641 = vpop.f32.mrb[0].mxu0
        %v642 = vadd.f32 %v460, %v641
        %v643 = vpop.f32.mrb[0].mxu0
        %644 = vmatprep.mubr.f32.mxu0 0.0
        %645 = vmatmul.mubr.f32.gmra.mrb[0].mxu0 %v503
        %v646 = vpop.f32.mrb[0].mxu0
        %v647 = vadd.f32 %v460, %v646
        %v648 = vpop.f32.mrb[0].mxu0
        %649 = vmatprep.mubr.f32.mxu0 0.0
        %650 = vmatmul.mubr.f32.gmra.mrb[0].mxu0 %v506
        %v651 = vpop.f32.mrb[0].mxu0
        %v652 = vadd.f32 %v460, %v651
        %v653 = vpop.f32.mrb[0].mxu0
        %654 = vmatprep.mubr.f32.mxu0 0.0
        %655 = vmatmul.mubr.f32.gmra.mrb[0].mxu0 %v509
        %v656 = vpop.f32.mrb[0].mxu0
        %v657 = vadd.f32 %v460, %v656
        %v658 = vpop.f32.mrb[0].mxu0
        %659 = vdwg.mxu0
        %v660 = vmax.f32 %v582, 0.0
        %v661 = vmax.f32 %v587, 0.0
        %v662 = vmax.f32 %v592, 0.0
        %v663 = vmax.f32 %v597, 0.0
        %v664 = vmax.f32 %v602, 0.0
        %v665 = vmax.f32 %v607, 0.0
        %v666 = vmax.f32 %v612, 0.0
        %v667 = vmax.f32 %v617, 0.0
        %v668 = vmax.f32 %v622, 0.0
        %v669 = vmax.f32 %v627, 0.0
        %v670 = vmax.f32 %v632, 0.0
        %v671 = vmax.f32 %v637, 0.0
        %v672 = vmax.f32 %v642, 0.0
        %v673 = vmax.f32 %v647, 0.0
        %v674 = vmax.f32 %v652, 0.0
        %v675 = vmax.f32 %v657, 0.0
        %v676 = vld [vmem:[%s3] sm:$0xff]
        %v677 = vld [vmem:[%s3 + $0x8] sm:$0xff]
        %v678 = vld [vmem:[%s3 + $0x10] sm:$0xff]
        %v679 = vld [vmem:[%s3 + $0x18] sm:$0xff]
        %v680 = vld [vmem:[%s4] sm:$0x1]
        %v682 = vlaneseq
        %v683 = vshrl.u32 %v682, 7
        %v684 = vsub.s32 0, %v683
        %v685 = vrot.slane %v680, %v684
        %vm687 = vcmask 261120
        %v689 = vsel %vm687, %v660, 0
        %v692 = vsel %vm687, %v661, 0
        %v695 = vsel %vm687, %v662, 0
        %v698 = vsel %vm687, %v663, 0
        %v701 = vsel %vm687, %v664, 0
        %v704 = vsel %vm687, %v665, 0
        %v707 = vsel %vm687, %v666, 0
        %v710 = vsel %vm687, %v667, 0
        %v713 = vsel %vm687, %v668, 0
        %v716 = vsel %vm687, %v669, 0
        %v719 = vsel %vm687, %v670, 0
        %v722 = vsel %vm687, %v671, 0
        %v725 = vsel %vm687, %v672, 0
        %v728 = vsel %vm687, %v673, 0
        %v731 = vsel %vm687, %v674, 0
        %v734 = vsel %vm687, %v675, 0
        %736 = vmatprep.subr.mxu0 0.0
        %737 = vmatpush1.msra.mxu0 %v676
        %738 = vmatprep.subr.mxu0 0.0
        %739 = vmatpush1.msra.mxu0 %v677
        %740 = vmatprep.subr.mxu0 0.0
        %741 = vmatpush1.msra.mxu0 %v678
        %742 = vmatprep.subr.mxu0 0.0
        %743 = vmatpush1.msra.mxu0 %v679
        %744 = vmatprep.subr.mxu0 0.0
        %745 = vmatpush1.msra.mxu0 0.0
        %746 = vmatprep.subr.mxu0 0.0
        %747 = vmatpush1.msra.mxu0 0.0
        %748 = vmatprep.subr.mxu0 0.0
        %749 = vmatpush1.msra.mxu0 0.0
        %750 = vmatprep.subr.mxu0 0.0
        %751 = vmatpush1.msra.mxu0 0.0
        %752 = vmatprep.subr.mxu0 0.0
        %753 = vmatpush1.msra.mxu0 0.0
        %754 = vmatprep.subr.mxu0 0.0
        %755 = vmatpush1.msra.mxu0 0.0
        %756 = vmatprep.subr.mxu0 0.0
        %757 = vmatpush1.msra.mxu0 0.0
        %758 = vmatprep.subr.mxu0 0.0
        %759 = vmatpush1.msra.mxu0 0.0
        %760 = vmatprep.subr.mxu0 0.0
        %761 = vmatpush1.msra.mxu0 0.0
        %762 = vmatprep.subr.mxu0 0.0
        %763 = vmatpush1.msra.mxu0 0.0
        %764 = vmatprep.subr.mxu0 0.0
        %765 = vmatpush1.msra.mxu0 0.0
        %766 = vmatprep.subr.mxu0 0.0
        %767 = vmatpush1.msra.mxu0 0.0
        %768 = vmatprep.subr.mxu0 0.0
        %769 = vmatpush1.msra.mxu0 0.0
        %770 = vmatprep.subr.mxu0 0.0
        %771 = vmatpush1.msra.mxu0 0.0
        %772 = vmatprep.subr.mxu0 0.0
        %773 = vmatpush1.msra.mxu0 0.0
        %774 = vmatprep.subr.mxu0 0.0
        %775 = vmatpush1.msra.mxu0 0.0
        %776 = vmatprep.subr.mxu0 0.0
        %777 = vmatpush1.msra.mxu0 0.0
        %778 = vmatprep.subr.mxu0 0.0
        %779 = vmatpush1.msra.mxu0 0.0
        %780 = vmatprep.subr.mxu0 0.0
        %781 = vmatpush1.msra.mxu0 0.0
        %782 = vmatprep.subr.mxu0 0.0
        %783 = vmatpush1.msra.mxu0 0.0
        %784 = vmatprep.subr.mxu0 0.0
        %785 = vmatpush1.msra.mxu0 0.0
        %786 = vmatprep.subr.mxu0 0.0
        %787 = vmatpush1.msra.mxu0 0.0
        %788 = vmatprep.subr.mxu0 0.0
        %789 = vmatpush1.msra.mxu0 0.0
        %790 = vmatprep.subr.mxu0 0.0
        %791 = vmatpush1.msra.mxu0 0.0
        %792 = vmatprep.subr.mxu0 0.0
        %793 = vmatpush1.msra.mxu0 0.0
        %794 = vmatprep.subr.mxu0 0.0
        %795 = vmatpush1.msra.mxu0 0.0
        %796 = vmatprep.subr.mxu0 0.0
        %797 = vmatpush1.msra.mxu0 0.0
        %798 = vmatprep.subr.mxu0 0.0
        %799 = vmatpush1.msra.mxu0 0.0
        %800 = vmatprep.mubr.f32.mxu0 0.0
        %801 = vmatmul.mubr.f32.gmra.mrb[0].mxu0 %v689
        %v802 = vpop.f32.mrb[0].mxu0
        %v803 = vadd.f32 %v685, %v802
        %v804 = vpop.f32.mrb[0].mxu0
        %805 = vmatprep.mubr.f32.mxu0 0.0
        %806 = vmatmul.mubr.f32.gmra.mrb[0].mxu0 %v692
        %v807 = vpop.f32.mrb[0].mxu0
        %v808 = vadd.f32 %v685, %v807
        %v809 = vpop.f32.mrb[0].mxu0
        %810 = vmatprep.mubr.f32.mxu0 0.0
        %811 = vmatmul.mubr.f32.gmra.mrb[0].mxu0 %v695
        %v812 = vpop.f32.mrb[0].mxu0
        %v813 = vadd.f32 %v685, %v812
        %v814 = vpop.f32.mrb[0].mxu0
        %815 = vmatprep.mubr.f32.mxu0 0.0
        %816 = vmatmul.mubr.f32.gmra.mrb[0].mxu0 %v698
        %v817 = vpop.f32.mrb[0].mxu0
        %v818 = vadd.f32 %v685, %v817
        %v819 = vpop.f32.mrb[0].mxu0
        %820 = vmatprep.mubr.f32.mxu0 0.0
        %821 = vmatmul.mubr.f32.gmra.mrb[0].mxu0 %v701
        %v822 = vpop.f32.mrb[0].mxu0
        %v823 = vadd.f32 %v685, %v822
        %v824 = vpop.f32.mrb[0].mxu0
        %825 = vmatprep.mubr.f32.mxu0 0.0
        %826 = vmatmul.mubr.f32.gmra.mrb[0].mxu0 %v704
        %v827 = vpop.f32.mrb[0].mxu0
        %v828 = vadd.f32 %v685, %v827
        %v829 = vpop.f32.mrb[0].mxu0
        %830 = vmatprep.mubr.f32.mxu0 0.0
        %831 = vmatmul.mubr.f32.gmra.mrb[0].mxu0 %v707
        %v832 = vpop.f32.mrb[0].mxu0
        %v833 = vadd.f32 %v685, %v832
        %v834 = vpop.f32.mrb[0].mxu0
        %835 = vmatprep.mubr.f32.mxu0 0.0
        %836 = vmatmul.mubr.f32.gmra.mrb[0].mxu0 %v710
        %v837 = vpop.f32.mrb[0].mxu0
        %v838 = vadd.f32 %v685, %v837
        %v839 = vpop.f32.mrb[0].mxu0
        %840 = vmatprep.mubr.f32.mxu0 0.0
        %841 = vmatmul.mubr.f32.gmra.mrb[0].mxu0 %v713
        %v842 = vpop.f32.mrb[0].mxu0
        %v843 = vadd.f32 %v685, %v842
        %v844 = vpop.f32.mrb[0].mxu0
        %845 = vmatprep.mubr.f32.mxu0 0.0
        %846 = vmatmul.mubr.f32.gmra.mrb[0].mxu0 %v716
        %v847 = vpop.f32.mrb[0].mxu0
        %v848 = vadd.f32 %v685, %v847
        %v849 = vpop.f32.mrb[0].mxu0
        %850 = vmatprep.mubr.f32.mxu0 0.0
        %851 = vmatmul.mubr.f32.gmra.mrb[0].mxu0 %v719
        %v852 = vpop.f32.mrb[0].mxu0
        %v853 = vadd.f32 %v685, %v852
        %v854 = vpop.f32.mrb[0].mxu0
        %855 = vmatprep.mubr.f32.mxu0 0.0
        %856 = vmatmul.mubr.f32.gmra.mrb[0].mxu0 %v722
        %v857 = vpop.f32.mrb[0].mxu0
        %v858 = vadd.f32 %v685, %v857
        %v859 = vpop.f32.mrb[0].mxu0
        %860 = vmatprep.mubr.f32.mxu0 0.0
        %861 = vmatmul.mubr.f32.gmra.mrb[0].mxu0 %v725
        %v862 = vpop.f32.mrb[0].mxu0
        %v863 = vadd.f32 %v685, %v862
        %v864 = vpop.f32.mrb[0].mxu0
        %865 = vmatprep.mubr.f32.mxu0 0.0
        %866 = vmatmul.mubr.f32.gmra.mrb[0].mxu0 %v728
        %v867 = vpop.f32.mrb[0].mxu0
        %v868 = vadd.f32 %v685, %v867
        %v869 = vpop.f32.mrb[0].mxu0
        %870 = vmatprep.mubr.f32.mxu0 0.0
        %871 = vmatmul.mubr.f32.gmra.mrb[0].mxu0 %v731
        %v872 = vpop.f32.mrb[0].mxu0
        %v873 = vadd.f32 %v685, %v872
        %v874 = vpop.f32.mrb[0].mxu0
        %875 = vmatprep.mubr.f32.mxu0 0.0
        %876 = vmatmul.mubr.f32.gmra.mrb[0].mxu0 %v734
        %v877 = vpop.f32.mrb[0].mxu0
        %v878 = vadd.f32 %v685, %v877
        %v879 = vpop.f32.mrb[0].mxu0
        %880 = vdwg.mxu0
        %v881 = vmax.f32 %v803, 0.0
        %v882 = vmax.f32 %v808, 0.0
        %v883 = vmax.f32 %v813, 0.0
        %v884 = vmax.f32 %v818, 0.0
        %v885 = vmax.f32 %v823, 0.0
        %v886 = vmax.f32 %v828, 0.0
        %v887 = vmax.f32 %v833, 0.0
        %v888 = vmax.f32 %v838, 0.0
        %v889 = vmax.f32 %v843, 0.0
        %v890 = vmax.f32 %v848, 0.0
        %v891 = vmax.f32 %v853, 0.0
        %v892 = vmax.f32 %v858, 0.0
        %v893 = vmax.f32 %v863, 0.0
        %v894 = vmax.f32 %v868, 0.0
        %v895 = vmax.f32 %v873, 0.0
        %v896 = vmax.f32 %v878, 0.0
        %v897 = vld [vmem:[%s5] sm:$0xff]
        %v898 = vld [vmem:[%s5 + $0x8] sm:$0xff]
        %v899 = vld [vmem:[%s5 + $0x10] sm:$0xff]
        %v900 = vld [vmem:[%s5 + $0x18] sm:$0xff]
        %v901 = vld [vmem:[%s5 + $0x20] sm:$0xff]
        %v902 = vld [vmem:[%s5 + $0x28] sm:$0xff]
        %v903 = vld [vmem:[%s5 + $0x30] sm:$0xff]
        %v904 = vld [vmem:[%s5 + $0x38] sm:$0xff]
        %v905 = vld [vmem:[%s6] sm:$0x1]
        %v907 = vlaneseq
        %v908 = vshrl.u32 %v907, 7
        %v909 = vsub.s32 0, %v908
        %v910 = vrot.slane %v905, %v909
        %vm912 = vcmask 523264
        %v914 = vsel %vm912, %v881, 0
        %v917 = vsel %vm912, %v882, 0
        %v920 = vsel %vm912, %v883, 0
        %v923 = vsel %vm912, %v884, 0
        %v926 = vsel %vm912, %v885, 0
        %v929 = vsel %vm912, %v886, 0
        %v932 = vsel %vm912, %v887, 0
        %v935 = vsel %vm912, %v888, 0
        %v938 = vsel %vm912, %v889, 0
        %v941 = vsel %vm912, %v890, 0
        %v944 = vsel %vm912, %v891, 0
        %v947 = vsel %vm912, %v892, 0
        %v950 = vsel %vm912, %v893, 0
        %v953 = vsel %vm912, %v894, 0
        %v956 = vsel %vm912, %v895, 0
        %v959 = vsel %vm912, %v896, 0
        %961 = vmatprep.subr.mxu0 0.0
        %962 = vmatpush1.msra.mxu0 %v897
        %963 = vmatprep.subr.mxu0 0.0
        %964 = vmatpush1.msra.mxu0 %v898
        %965 = vmatprep.subr.mxu0 0.0
        %966 = vmatpush1.msra.mxu0 %v899
        %967 = vmatprep.subr.mxu0 0.0
        %968 = vmatpush1.msra.mxu0 %v900
        %969 = vmatprep.subr.mxu0 0.0
        %970 = vmatpush1.msra.mxu0 %v901
        %971 = vmatprep.subr.mxu0 0.0
        %972 = vmatpush1.msra.mxu0 %v902
        %973 = vmatprep.subr.mxu0 0.0
        %974 = vmatpush1.msra.mxu0 %v903
        %975 = vmatprep.subr.mxu0 0.0
        %976 = vmatpush1.msra.mxu0 %v904
        %977 = vmatprep.subr.mxu0 0.0
        %978 = vmatpush1.msra.mxu0 0.0
        %979 = vmatprep.subr.mxu0 0.0
        %980 = vmatpush1.msra.mxu0 0.0
        %981 = vmatprep.subr.mxu0 0.0
        %982 = vmatpush1.msra.mxu0 0.0
        %983 = vmatprep.subr.mxu0 0.0
        %984 = vmatpush1.msra.mxu0 0.0
        %985 = vmatprep.subr.mxu0 0.0
        %986 = vmatpush1.msra.mxu0 0.0
        %987 = vmatprep.subr.mxu0 0.0
        %988 = vmatpush1.msra.mxu0 0.0
        %989 = vmatprep.subr.mxu0 0.0
        %990 = vmatpush1.msra.mxu0 0.0
        %991 = vmatprep.subr.mxu0 0.0
        %992 = vmatpush1.msra.mxu0 0.0
        %993 = vmatprep.subr.mxu0 0.0
        %994 = vmatpush1.msra.mxu0 0.0
        %995 = vmatprep.subr.mxu0 0.0
        %996 = vmatpush1.msra.mxu0 0.0
        %997 = vmatprep.subr.mxu0 0.0
        %998 = vmatpush1.msra.mxu0 0.0
        %999 = vmatprep.subr.mxu0 0.0
        %1000 = vmatpush1.msra.mxu0 0.0
        %1001 = vmatprep.subr.mxu0 0.0
        %1002 = vmatpush1.msra.mxu0 0.0
        %1003 = vmatprep.subr.mxu0 0.0
        %1004 = vmatpush1.msra.mxu0 0.0
        %1005 = vmatprep.subr.mxu0 0.0
        %1006 = vmatpush1.msra.mxu0 0.0
        %1007 = vmatprep.subr.mxu0 0.0
        %1008 = vmatpush1.msra.mxu0 0.0
        %1009 = vmatprep.subr.mxu0 0.0
        %1010 = vmatpush1.msra.mxu0 0.0
        %1011 = vmatprep.subr.mxu0 0.0
        %1012 = vmatpush1.msra.mxu0 0.0
        %1013 = vmatprep.subr.mxu0 0.0
        %1014 = vmatpush1.msra.mxu0 0.0
        %1015 = vmatprep.subr.mxu0 0.0
        %1016 = vmatpush1.msra.mxu0 0.0
        %1017 = vmatprep.subr.mxu0 0.0
        %1018 = vmatpush1.msra.mxu0 0.0
        %1019 = vmatprep.subr.mxu0 0.0
        %1020 = vmatpush1.msra.mxu0 0.0
        %1021 = vmatprep.subr.mxu0 0.0
        %1022 = vmatpush1.msra.mxu0 0.0
        %1023 = vmatprep.subr.mxu0 0.0
        %1024 = vmatpush1.msra.mxu0 0.0
        %1025 = vmatprep.mubr.f32.mxu0 0.0
        %1026 = vmatmul.mubr.f32.gmra.mrb[0].mxu0 %v914
        %v1027 = vpop.f32.mrb[0].mxu0
        %v1028 = vadd.f32 %v910, %v1027
        %v1029 = vpop.f32.mrb[0].mxu0
        %1030 = vmatprep.mubr.f32.mxu0 0.0
        %1031 = vmatmul.mubr.f32.gmra.mrb[0].mxu0 %v917
        %v1032 = vpop.f32.mrb[0].mxu0
        %v1033 = vadd.f32 %v910, %v1032
        %v1034 = vpop.f32.mrb[0].mxu0
        %1035 = vmatprep.mubr.f32.mxu0 0.0
        %1036 = vmatmul.mubr.f32.gmra.mrb[0].mxu0 %v920
        %v1037 = vpop.f32.mrb[0].mxu0
        %v1038 = vadd.f32 %v910, %v1037
        %v1039 = vpop.f32.mrb[0].mxu0
        %1040 = vmatprep.mubr.f32.mxu0 0.0
        %1041 = vmatmul.mubr.f32.gmra.mrb[0].mxu0 %v923
        %v1042 = vpop.f32.mrb[0].mxu0
        %v1043 = vadd.f32 %v910, %v1042
        %v1044 = vpop.f32.mrb[0].mxu0
        %1045 = vmatprep.mubr.f32.mxu0 0.0
        %1046 = vmatmul.mubr.f32.gmra.mrb[0].mxu0 %v926
        %v1047 = vpop.f32.mrb[0].mxu0
        %v1048 = vadd.f32 %v910, %v1047
        %v1049 = vpop.f32.mrb[0].mxu0
        %1050 = vmatprep.mubr.f32.mxu0 0.0
        %1051 = vmatmul.mubr.f32.gmra.mrb[0].mxu0 %v929
        %v1052 = vpop.f32.mrb[0].mxu0
        %v1053 = vadd.f32 %v910, %v1052
        %v1054 = vpop.f32.mrb[0].mxu0
        %1055 = vmatprep.mubr.f32.mxu0 0.0
        %1056 = vmatmul.mubr.f32.gmra.mrb[0].mxu0 %v932
        %v1057 = vpop.f32.mrb[0].mxu0
        %v1058 = vadd.f32 %v910, %v1057
        %v1059 = vpop.f32.mrb[0].mxu0
        %1060 = vmatprep.mubr.f32.mxu0 0.0
        %1061 = vmatmul.mubr.f32.gmra.mrb[0].mxu0 %v935
        %v1062 = vpop.f32.mrb[0].mxu0
        %v1063 = vadd.f32 %v910, %v1062
        %v1064 = vpop.f32.mrb[0].mxu0
        %1065 = vmatprep.mubr.f32.mxu0 0.0
        %1066 = vmatmul.mubr.f32.gmra.mrb[0].mxu0 %v938
        %v1067 = vpop.f32.mrb[0].mxu0
        %v1068 = vadd.f32 %v910, %v1067
        %v1069 = vpop.f32.mrb[0].mxu0
        %1070 = vmatprep.mubr.f32.mxu0 0.0
        %1071 = vmatmul.mubr.f32.gmra.mrb[0].mxu0 %v941
        %v1072 = vpop.f32.mrb[0].mxu0
        %v1073 = vadd.f32 %v910, %v1072
        %v1074 = vpop.f32.mrb[0].mxu0
        %1075 = vmatprep.mubr.f32.mxu0 0.0
        %1076 = vmatmul.mubr.f32.gmra.mrb[0].mxu0 %v944
        %v1077 = vpop.f32.mrb[0].mxu0
        %v1078 = vadd.f32 %v910, %v1077
        %v1079 = vpop.f32.mrb[0].mxu0
        %1080 = vmatprep.mubr.f32.mxu0 0.0
        %1081 = vmatmul.mubr.f32.gmra.mrb[0].mxu0 %v947
        %v1082 = vpop.f32.mrb[0].mxu0
        %v1083 = vadd.f32 %v910, %v1082
        %v1084 = vpop.f32.mrb[0].mxu0
        %1085 = vmatprep.mubr.f32.mxu0 0.0
        %1086 = vmatmul.mubr.f32.gmra.mrb[0].mxu0 %v950
        %v1087 = vpop.f32.mrb[0].mxu0
        %v1088 = vadd.f32 %v910, %v1087
        %v1089 = vpop.f32.mrb[0].mxu0
        %1090 = vmatprep.mubr.f32.mxu0 0.0
        %1091 = vmatmul.mubr.f32.gmra.mrb[0].mxu0 %v953
        %v1092 = vpop.f32.mrb[0].mxu0
        %v1093 = vadd.f32 %v910, %v1092
        %v1094 = vpop.f32.mrb[0].mxu0
        %1095 = vmatprep.mubr.f32.mxu0 0.0
        %1096 = vmatmul.mubr.f32.gmra.mrb[0].mxu0 %v956
        %v1097 = vpop.f32.mrb[0].mxu0
        %v1098 = vadd.f32 %v910, %v1097
        %v1099 = vpop.f32.mrb[0].mxu0
        %1100 = vmatprep.mubr.f32.mxu0 0.0
        %1101 = vmatmul.mubr.f32.gmra.mrb[0].mxu0 %v959
        %v1102 = vpop.f32.mrb[0].mxu0
        %v1103 = vadd.f32 %v910, %v1102
        %v1104 = vpop.f32.mrb[0].mxu0
        %1105 = vdwg.mxu0
        %v1106 = vmax.f32 %v1028, 0.0
        %v1107 = vmax.f32 %v1033, 0.0
        %v1108 = vmax.f32 %v1038, 0.0
        %v1109 = vmax.f32 %v1043, 0.0
        %v1110 = vmax.f32 %v1048, 0.0
        %v1111 = vmax.f32 %v1053, 0.0
        %v1112 = vmax.f32 %v1058, 0.0
        %v1113 = vmax.f32 %v1063, 0.0
        %v1114 = vmax.f32 %v1068, 0.0
        %v1115 = vmax.f32 %v1073, 0.0
        %v1116 = vmax.f32 %v1078, 0.0
        %v1117 = vmax.f32 %v1083, 0.0
        %v1118 = vmax.f32 %v1088, 0.0
        %v1119 = vmax.f32 %v1093, 0.0
        %v1120 = vmax.f32 %v1098, 0.0
        %v1121 = vmax.f32 %v1103, 0.0
        %v1122 = vmax.f32 %v1106, %v1110
        %v1123 = vmax.f32 %v1107, %v1111
        %v1124 = vmax.f32 %v1108, %v1112
        %v1125 = vmax.f32 %v1109, %v1113
        %v1126 = vmax.f32 %v1122, %v1114
        %v1127 = vmax.f32 %v1123, %v1115
        %v1128 = vmax.f32 %v1124, %v1116
        %v1129 = vmax.f32 %v1125, %v1117
        %v1130 = vmax.f32 %v1126, %v1118
        %v1131 = vmax.f32 %v1127, %v1119
        %v1132 = vmax.f32 %v1128, %v1120
        %v1133 = vmax.f32 %v1129, %v1121
        %v1134 = vmax.f32 %v1130, %v1131
        %v1135 = vmax.f32 %v1132, %v1133
        %v1136 = vmax.f32 %v1134, %v1135
        %v1137 = vrot.slane %v1136, 4
        %v1138 = vmax.f32 %v1136, %v1137
        %v1139 = vrot.slane %v1138, 2
        %v1140 = vmax.f32 %v1138, %v1139
        %v1141 = vrot.slane %v1140, 1
        %v1142 = vmax.f32 %v1140, %v1141
        %v1143 = vld [vmem:[%s7] sm:$0xff]
        %v1144 = vld [vmem:[%s7 + $0x8] sm:$0xff]
        %v1145 = vld [vmem:[%s7 + $0x10] sm:$0xff]
        %v1146 = vld [vmem:[%s7 + $0x18] sm:$0xff]
        %v1147 = vld [vmem:[%s7 + $0x20] sm:$0xff]
        %v1148 = vld [vmem:[%s7 + $0x28] sm:$0xff]
        %v1149 = vld [vmem:[%s7 + $0x30] sm:$0xff]
        %v1150 = vld [vmem:[%s7 + $0x38] sm:$0xff]
        %v1151 = vld [vmem:[%s7 + $0x40] sm:$0xff]
        %v1152 = vld [vmem:[%s7 + $0x48] sm:$0xff]
        %v1153 = vld [vmem:[%s7 + $0x50] sm:$0xff]
        %v1154 = vld [vmem:[%s7 + $0x58] sm:$0xff]
        %v1155 = vld [vmem:[%s7 + $0x60] sm:$0xff]
        %v1156 = vld [vmem:[%s7 + $0x68] sm:$0xff]
        %v1157 = vld [vmem:[%s7 + $0x70] sm:$0xff]
        %v1158 = vld [vmem:[%s7 + $0x78] sm:$0xff]
        %v1159 = vld [vmem:[%s8] sm:$0x1]
        %1160 = vmatprep.subr.mxu0 0.0
        %1161 = vmatpush1.msra.mxu0 %v1143
        %1162 = vmatprep.subr.mxu0 0.0
        %1163 = vmatpush1.msra.mxu0 %v1144
        %1164 = vmatprep.subr.mxu0 0.0
        %1165 = vmatpush1.msra.mxu0 %v1145
        %1166 = vmatprep.subr.mxu0 0.0
        %1167 = vmatpush1.msra.mxu0 %v1146
        %1168 = vmatprep.subr.mxu0 0.0
        %1169 = vmatpush1.msra.mxu0 %v1147
        %1170 = vmatprep.subr.mxu0 0.0
        %1171 = vmatpush1.msra.mxu0 %v1148
        %1172 = vmatprep.subr.mxu0 0.0
        %1173 = vmatpush1.msra.mxu0 %v1149
        %1174 = vmatprep.subr.mxu0 0.0
        %1175 = vmatpush1.msra.mxu0 %v1150
        %1176 = vmatprep.subr.mxu0 0.0
        %1177 = vmatpush1.msra.mxu0 %v1151
        %1178 = vmatprep.subr.mxu0 0.0
        %1179 = vmatpush1.msra.mxu0 %v1152
        %1180 = vmatprep.subr.mxu0 0.0
        %1181 = vmatpush1.msra.mxu0 %v1153
        %1182 = vmatprep.subr.mxu0 0.0
        %1183 = vmatpush1.msra.mxu0 %v1154
        %1184 = vmatprep.subr.mxu0 0.0
        %1185 = vmatpush1.msra.mxu0 %v1155
        %1186 = vmatprep.subr.mxu0 0.0
        %1187 = vmatpush1.msra.mxu0 %v1156
        %1188 = vmatprep.subr.mxu0 0.0
        %1189 = vmatpush1.msra.mxu0 %v1157
        %1190 = vmatprep.subr.mxu0 0.0
        %1191 = vmatpush1.msra.mxu0 %v1158
        %1192 = vmatprep.subr.mxu0 0.0
        %1193 = vmatpush1.msra.mxu0 0.0
        %1194 = vmatprep.subr.mxu0 0.0
        %1195 = vmatpush1.msra.mxu0 0.0
        %1196 = vmatprep.subr.mxu0 0.0
        %1197 = vmatpush1.msra.mxu0 0.0
        %1198 = vmatprep.subr.mxu0 0.0
        %1199 = vmatpush1.msra.mxu0 0.0
        %1200 = vmatprep.subr.mxu0 0.0
        %1201 = vmatpush1.msra.mxu0 0.0
        %1202 = vmatprep.subr.mxu0 0.0
        %1203 = vmatpush1.msra.mxu0 0.0
        %1204 = vmatprep.subr.mxu0 0.0
        %1205 = vmatpush1.msra.mxu0 0.0
        %1206 = vmatprep.subr.mxu0 0.0
        %1207 = vmatpush1.msra.mxu0 0.0
        %1208 = vmatprep.subr.mxu0 0.0
        %1209 = vmatpush1.msra.mxu0 0.0
        %1210 = vmatprep.subr.mxu0 0.0
        %1211 = vmatpush1.msra.mxu0 0.0
        %1212 = vmatprep.subr.mxu0 0.0
        %1213 = vmatpush1.msra.mxu0 0.0
        %1214 = vmatprep.subr.mxu0 0.0
        %1215 = vmatpush1.msra.mxu0 0.0
        %1216 = vmatprep.subr.mxu0 0.0
        %1217 = vmatpush1.msra.mxu0 0.0
        %1218 = vmatprep.subr.mxu0 0.0
        %1219 = vmatpush1.msra.mxu0 0.0
        %1220 = vmatprep.subr.mxu0 0.0
        %1221 = vmatpush1.msra.mxu0 0.0
        %1222 = vmatprep.subr.mxu0 0.0
        %1223 = vmatpush1.msra.mxu0 0.0
        %1224 = vmatprep.mubr.f32.mxu0 0.0
        %1225 = vmatmul.mubr.f32.gmra.mrb[0].mxu0 %v1142
        %v1226 = vpop.f32.mrb[0].mxu0
        %v1227 = vadd.f32 %v1159, %v1226
        %v1228 = vpop.f32.mrb[0].mxu0
        %1229 = vdwg.mxu0
        %v1230 = vmax.f32 %v1227, 0.0
        %v1231 = vld [vmem:[%s9] sm:$0xff]
        %v1232 = vld [vmem:[%s9 + $0x8] sm:$0xff]
        %v1233 = vld [vmem:[%s9 + $0x10] sm:$0xff]
        %v1234 = vld [vmem:[%s9 + $0x18] sm:$0xff]
        %v1235 = vld [vmem:[%s9 + $0x20] sm:$0xff]
        %v1236 = vld [vmem:[%s9 + $0x28] sm:$0xff]
        %v1237 = vld [vmem:[%s9 + $0x30] sm:$0xff]
        %v1238 = vld [vmem:[%s9 + $0x38] sm:$0xff]
        %v1239 = vld [vmem:[%s10] sm:$0x1]
        %v1241 = vsel %vm912, %v1230, 0
        %1243 = vmatprep.subr.mxu0 0.0
        %1244 = vmatpush1.msra.mxu0 %v1231
        %1245 = vmatprep.subr.mxu0 0.0
        %1246 = vmatpush1.msra.mxu0 %v1232
        %1247 = vmatprep.subr.mxu0 0.0
        %1248 = vmatpush1.msra.mxu0 %v1233
        %1249 = vmatprep.subr.mxu0 0.0
        %1250 = vmatpush1.msra.mxu0 %v1234
        %1251 = vmatprep.subr.mxu0 0.0
        %1252 = vmatpush1.msra.mxu0 %v1235
        %1253 = vmatprep.subr.mxu0 0.0
        %1254 = vmatpush1.msra.mxu0 %v1236
        %1255 = vmatprep.subr.mxu0 0.0
        %1256 = vmatpush1.msra.mxu0 %v1237
        %1257 = vmatprep.subr.mxu0 0.0
        %1258 = vmatpush1.msra.mxu0 %v1238
        %1259 = vmatprep.subr.mxu0 0.0
        %1260 = vmatpush1.msra.mxu0 0.0
        %1261 = vmatprep.subr.mxu0 0.0
        %1262 = vmatpush1.msra.mxu0 0.0
        %1263 = vmatprep.subr.mxu0 0.0
        %1264 = vmatpush1.msra.mxu0 0.0
        %1265 = vmatprep.subr.mxu0 0.0
        %1266 = vmatpush1.msra.mxu0 0.0
        %1267 = vmatprep.subr.mxu0 0.0
        %1268 = vmatpush1.msra.mxu0 0.0
        %1269 = vmatprep.subr.mxu0 0.0
        %1270 = vmatpush1.msra.mxu0 0.0
        %1271 = vmatprep.subr.mxu0 0.0
        %1272 = vmatpush1.msra.mxu0 0.0
        %1273 = vmatprep.subr.mxu0 0.0
        %1274 = vmatpush1.msra.mxu0 0.0
        %1275 = vmatprep.subr.mxu0 0.0
        %1276 = vmatpush1.msra.mxu0 0.0
        %1277 = vmatprep.subr.mxu0 0.0
        %1278 = vmatpush1.msra.mxu0 0.0
        %1279 = vmatprep.subr.mxu0 0.0
        %1280 = vmatpush1.msra.mxu0 0.0
        %1281 = vmatprep.subr.mxu0 0.0
        %1282 = vmatpush1.msra.mxu0 0.0
        %1283 = vmatprep.subr.mxu0 0.0
        %1284 = vmatpush1.msra.mxu0 0.0
        %1285 = vmatprep.subr.mxu0 0.0
        %1286 = vmatpush1.msra.mxu0 0.0
        %1287 = vmatprep.subr.mxu0 0.0
        %1288 = vmatpush1.msra.mxu0 0.0
        %1289 = vmatprep.subr.mxu0 0.0
        %1290 = vmatpush1.msra.mxu0 0.0
        %1291 = vmatprep.subr.mxu0 0.0
        %1292 = vmatpush1.msra.mxu0 0.0
        %1293 = vmatprep.subr.mxu0 0.0
        %1294 = vmatpush1.msra.mxu0 0.0
        %1295 = vmatprep.subr.mxu0 0.0
        %1296 = vmatpush1.msra.mxu0 0.0
        %1297 = vmatprep.subr.mxu0 0.0
        %1298 = vmatpush1.msra.mxu0 0.0
        %1299 = vmatprep.subr.mxu0 0.0
        %1300 = vmatpush1.msra.mxu0 0.0
        %1301 = vmatprep.subr.mxu0 0.0
        %1302 = vmatpush1.msra.mxu0 0.0
        %1303 = vmatprep.subr.mxu0 0.0
        %1304 = vmatpush1.msra.mxu0 0.0
        %1305 = vmatprep.subr.mxu0 0.0
        %1306 = vmatpush1.msra.mxu0 0.0
        %1307 = vmatprep.mubr.f32.mxu0 0.0
        %1308 = vmatmul.mubr.f32.gmra.mrb[0].mxu0 %v1241
        %v1309 = vpop.f32.mrb[0].mxu0
        %v1310 = vadd.f32 %v1239, %v1309
        %v1311 = vpop.f32.mrb[0].mxu0
        %1312 = vdwg.mxu0
        %v1313 = vmax.f32 %v1310, 0.0
        %v1314 = vld [vmem:[%s11] sm:$0xff]
        %v1315 = vld [vmem:[%s11 + $0x8] sm:$0xff]
        %v1316 = vld [vmem:[%s11 + $0x10] sm:$0xff]
        %v1317 = vld [vmem:[%s11 + $0x18] sm:$0xff]
        %v1318 = vld [vmem:[%s12] sm:$0x1]
        %v1320 = vsel %vm687, %v1313, 0
        %1322 = vmatprep.subr.mxu0 0.0
        %1323 = vmatpush1.msra.mxu0 %v1314
        %1324 = vmatprep.subr.mxu0 0.0
        %1325 = vmatpush1.msra.mxu0 %v1315
        %1326 = vmatprep.subr.mxu0 0.0
        %1327 = vmatpush1.msra.mxu0 %v1316
        %1328 = vmatprep.subr.mxu0 0.0
        %1329 = vmatpush1.msra.mxu0 %v1317
        %1330 = vmatprep.subr.mxu0 0.0
        %1331 = vmatpush1.msra.mxu0 0.0
        %1332 = vmatprep.subr.mxu0 0.0
        %1333 = vmatpush1.msra.mxu0 0.0
        %1334 = vmatprep.subr.mxu0 0.0
        %1335 = vmatpush1.msra.mxu0 0.0
        %1336 = vmatprep.subr.mxu0 0.0
        %1337 = vmatpush1.msra.mxu0 0.0
        %1338 = vmatprep.subr.mxu0 0.0
        %1339 = vmatpush1.msra.mxu0 0.0
        %1340 = vmatprep.subr.mxu0 0.0
        %1341 = vmatpush1.msra.mxu0 0.0
        %1342 = vmatprep.subr.mxu0 0.0
        %1343 = vmatpush1.msra.mxu0 0.0
        %1344 = vmatprep.subr.mxu0 0.0
        %1345 = vmatpush1.msra.mxu0 0.0
        %1346 = vmatprep.subr.mxu0 0.0
        %1347 = vmatpush1.msra.mxu0 0.0
        %1348 = vmatprep.subr.mxu0 0.0
        %1349 = vmatpush1.msra.mxu0 0.0
        %1350 = vmatprep.subr.mxu0 0.0
        %1351 = vmatpush1.msra.mxu0 0.0
        %1352 = vmatprep.subr.mxu0 0.0
        %1353 = vmatpush1.msra.mxu0 0.0
        %1354 = vmatprep.subr.mxu0 0.0
        %1355 = vmatpush1.msra.mxu0 0.0
        %1356 = vmatprep.subr.mxu0 0.0
        %1357 = vmatpush1.msra.mxu0 0.0
        %1358 = vmatprep.subr.mxu0 0.0
        %1359 = vmatpush1.msra.mxu0 0.0
        %1360 = vmatprep.subr.mxu0 0.0
        %1361 = vmatpush1.msra.mxu0 0.0
        %1362 = vmatprep.subr.mxu0 0.0
        %1363 = vmatpush1.msra.mxu0 0.0
        %1364 = vmatprep.subr.mxu0 0.0
        %1365 = vmatpush1.msra.mxu0 0.0
        %1366 = vmatprep.subr.mxu0 0.0
        %1367 = vmatpush1.msra.mxu0 0.0
        %1368 = vmatprep.subr.mxu0 0.0
        %1369 = vmatpush1.msra.mxu0 0.0
        %1370 = vmatprep.subr.mxu0 0.0
        %1371 = vmatpush1.msra.mxu0 0.0
        %1372 = vmatprep.subr.mxu0 0.0
        %1373 = vmatpush1.msra.mxu0 0.0
        %1374 = vmatprep.subr.mxu0 0.0
        %1375 = vmatpush1.msra.mxu0 0.0
        %1376 = vmatprep.subr.mxu0 0.0
        %1377 = vmatpush1.msra.mxu0 0.0
        %1378 = vmatprep.subr.mxu0 0.0
        %1379 = vmatpush1.msra.mxu0 0.0
        %1380 = vmatprep.subr.mxu0 0.0
        %1381 = vmatpush1.msra.mxu0 0.0
        %1382 = vmatprep.subr.mxu0 0.0
        %1383 = vmatpush1.msra.mxu0 0.0
        %1384 = vmatprep.subr.mxu0 0.0
        %1385 = vmatpush1.msra.mxu0 0.0
        %1386 = vmatprep.mubr.f32.mxu0 0.0
        %1387 = vmatmul.mubr.f32.gmra.mrb[0].mxu0 %v1320
        %v1388 = vpop.f32.mrb[0].mxu0
        %v1389 = vadd.f32 %v1318, %v1388
        %v1390 = vpop.f32.mrb[0].mxu0
        %1391 = vdwg.mxu0
        %vm1392 = vcmask 65536
        %1393 = vst.msk [vmem:[%s432] sm:$0x1] %vm1392, %v1389
        %s1394 = sand.u32 %s313, 1
        %s1395 = scalar_lea.sflag [#allocation3], %s1394
        %s1396 = sand.u32 %s313, 1
        %s1397 = scalar_lea.vmem [#allocation2], %s1396
        // Predicated region
        $region73: #{tpu_custom_call.1} parent=71 // pred_check
          %p1398 = pneg %p323
        $region74: #{tpu_custom_call.1} parent=71 // pred_check_branch
          %1400 = sbr.rel (%p1398) target = $region76
        $region75: #{tpu_custom_call.1} parent=71 // pred_region
          %s1402 = ssub.s32 16, 16
          %1403 = vsyncadd %s1395, %s1402
          %s1404 = smul.addr %s27, 16
          %s1405 = scalar_lea.hbm %s13, %s1404
          %s1407 = sshll.u32 %s1397, 4
          %s1408 = int_to_ptr.vmem [resolvable:$true] %s1407
          %1410 = dma.vmem_to_hbm [thread:$0]  %s1408, 16, %s1405, %s1395
        $region76: #{tpu_custom_call.1} parent=71 // pred_fallthru
          _
      $region72: #{tpu_custom_call.1} parent=5 // pred_fallthru
        _
      %p1411 = scmp.le.s32.totalorder 2, %s22
      // Predicated region
      $region77: #{tpu_custom_call.1} parent=5 // pred_check
        %p1412 = pneg %p1411
      $region78: #{tpu_custom_call.1} parent=5 // pred_check_branch
        %1414 = sbr.rel (%p1412) target = $region80
      $region79: #{tpu_custom_call.1} parent=5 // pred_region
        %s1415 = ssub.s32 %s22, 2
        // Predicated region
        $region81: #{tpu_custom_call.1} parent=79 // pred_check
          %p1416 = pneg %p329
        $region82: #{tpu_custom_call.1} parent=79 // pred_check_branch
          %1418 = sbr.rel (%p1416) target = $region84
        $region83: #{tpu_custom_call.1} parent=79 // pred_region
          %s1419 = sand.u32 %s314, 1
          %s1420 = scalar_lea.sflag [#allocation3], %s1419
          %s1421 = sand.u32 %s314, 1
          %s1422 = scalar_lea.vmem [#allocation2], %s1421
          %1423 = dma.done %s1420, 16
        $region84: #{tpu_custom_call.1} parent=79 // pred_fallthru
          _
      $region80: #{tpu_custom_call.1} parent=5 // pred_fallthru
        _
    $region6: #{tpu_custom_call.1} parent=1 // loop_footer
      %s26 = sadd.s32 1, %s22
    $region7: #{tpu_custom_call.1} parent=1 // loop_footer_branch
      %21 = sbr.rel target = $region3
    $region8: #{tpu_custom_call.1} parent=1 // loop_exit
      _
    %1424 = vsyncpa [#allocation3], 1
    %s1425 = scalar_lea.sflag [#allocation3], 1
    %1426 = vsyncpa %s1425, 1

</llo_original>
